<compile_context>
chip_gen: v7x
topology: tpu7x:2x2x1
jax: 0.10.0
libtpu: 0.0.40
codegen_flags: <defaults>
</compile_context>

<pallas_src>
import functools

import jax
import jax.numpy as jnp
from jax.experimental import pallas as pl
from jax.experimental.pallas import tpu as pltpu

LANE = 128


def _round_up(v, m):
    return ((v + m - 1) // m) * m


def _pad2d(x, rows, cols):
    r, c = x.shape
    return jnp.pad(x, ((0, rows - r), (0, cols - c)))


def _vmem_capacity_bytes():
    try:
        return int(pltpu.get_tpu_info().vmem_capacity_bytes)
    except Exception:
        return 64 << 20          # smallest per-TensorCore VMEM across v5e/v6e/v7x


def _masked_max_rows(mask_t, h_f32):
    """Per-graph masked max. mask_t: (T, G) f32, h_f32: (T, F) f32 -> [(1, F)] * G."""
    rows = []
    for g in range(mask_t.shape[1]):
        keep = mask_t[:, g:g + 1] > 0.5                       # (T, 1)
        rows.append(jnp.max(jnp.where(keep, h_f32, -jnp.inf), axis=0, keepdims=True))
    return rows


# ----------------------------- Pallas kernels ------------------------------ #

def fused_forward_kernel(a_ref, x_ref, ws_ref, bs_ref, maskt_ref, wl_ref, bl_ref,
                         o_ref, pooled_ref, *, n_layers, compute_dtype):
    # Whole forward in one kernel: all operands VMEM-resident, A_hat read once.
    a = a_ref[...]                                            # (N, N) compute dtype
    h = x_ref[...]                                            # (N, F) compute dtype
    for i in range(n_layers):
        xw = jnp.dot(h, ws_ref[i],
                     preferred_element_type=jnp.float32).astype(compute_dtype)
        agg = jnp.dot(a, xw, preferred_element_type=jnp.float32) + bs_ref[i]
        h = jnp.maximum(agg, 0.0).astype(compute_dtype)
    hf = h.astype(jnp.float32)
    rows = _masked_max_rows(maskt_ref[...], hf)
    for g, row in enumerate(rows):
        pooled_ref[g:g + 1, :] = row
    # F.dropout(p=0.5) is identity in eval mode; head matmul kept in f32.
    o_ref[...] = (jnp.dot(pooled_ref[...], wl_ref[...],
                          preferred_element_type=jnp.float32) + bl_ref[...])


def xw_kernel(x_ref, w_ref, o_ref):
    # One node-row tile of X @ W (W is small and fully VMEM-resident).
    o_ref[...] = jnp.dot(x_ref[...], w_ref[...],
                         preferred_element_type=jnp.float32).astype(o_ref.dtype)


def aggregate_resident_kernel(a_ref, xw_ref, b_ref, o_ref, acc_ref):
    # XW stays VMEM-resident across the whole grid (constant block index);
    # the k-chunk is sliced in-kernel.  out = relu(sum_k A[i,k] @ XW[k] + b).
    k = pl.program_id(1)
    tk = a_ref.shape[1]

    @pl.when(k == 0)
    def _():
        acc_ref[...] = jnp.zeros_like(acc_ref)

    start = pl.multiple_of(k * tk, LANE)
    acc_ref[...] += jnp.dot(a_ref[...], xw_ref[pl.ds(start, tk), :],
                            preferred_element_type=jnp.float32)

    @pl.when(k == pl.num_programs(1) - 1)
    def _():
        o_ref[...] = jnp.maximum(acc_ref[...] + b_ref[...], 0.0).astype(o_ref.dtype)


def aggregate_streamed_kernel(a_ref, xw_ref, b_ref, o_ref, acc_ref):
    # Fallback when XW does not fit in the VMEM budget: stream (tk, F) blocks.
    k = pl.program_id(1)

    @pl.when(k == 0)
    def _():
        acc_ref[...] = jnp.zeros_like(acc_ref)

    acc_ref[...] += jnp.dot(a_ref[...], xw_ref[...],
                            preferred_element_type=jnp.float32)

    @pl.when(k == pl.num_programs(1) - 1)
    def _():
        o_ref[...] = jnp.maximum(acc_ref[...] + b_ref[...], 0.0).astype(o_ref.dtype)


def pool_lin_kernel(maskt_ref, h_ref, wl_ref, bl_ref, o_ref, acc_ref):
    # Running per-graph max over node row-blocks; f32 head applied once at end.
    i = pl.program_id(0)

    @pl.when(i == 0)
    def _():
        acc_ref[...] = jnp.full_like(acc_ref, -jnp.inf)

    rows = _masked_max_rows(maskt_ref[...], h_ref[...].astype(jnp.float32))
    for g, row in enumerate(rows):
        acc_ref[g:g + 1, :] = jnp.maximum(acc_ref[g:g + 1, :], row)

    @pl.when(i == pl.num_programs(0) - 1)
    def _():
        # dropout(p=0.5) identity in eval mode; wl/bl are f32 (no downcast).
        o_ref[...] = (jnp.dot(acc_ref[...], wl_ref[...],
                              preferred_element_type=jnp.float32) + bl_ref[...])


# ----------------------------- Pallas wrappers ------------------------------ #

def fused_forward(a_hat, x, ws, bs, mask_t, wl, bl, *, n_layers, compute_dtype,
                  vmem_limit):
    np_, fp = x.shape
    g = mask_t.shape[1]
    pp = wl.shape[1]
    kernel = functools.partial(fused_forward_kernel, n_layers=n_layers,
                               compute_dtype=compute_dtype)
    return pl.pallas_call(
        kernel,
        out_shape=jax.ShapeDtypeStruct((g, pp), jnp.float32),
        grid_spec=pltpu.PrefetchScalarGridSpec(
            num_scalar_prefetch=0,
            grid=(1,),
            in_specs=[pl.BlockSpec((np_, np_), lambda i: (0, 0)),
                      pl.BlockSpec((np_, fp), lambda i: (0, 0)),
                      pl.BlockSpec((n_layers, fp, fp), lambda i: (0, 0, 0)),
                      pl.BlockSpec((n_layers, 1, fp), lambda i: (0, 0, 0)),
                      pl.BlockSpec((np_, g), lambda i: (0, 0)),
                      pl.BlockSpec((fp, pp), lambda i: (0, 0)),
                      pl.BlockSpec((1, pp), lambda i: (0, 0))],
            out_specs=pl.BlockSpec((g, pp), lambda i: (0, 0)),
            scratch_shapes=[pltpu.VMEM((g, fp), jnp.float32)]),
        compiler_params=pltpu.CompilerParams(
            dimension_semantics=("arbitrary",),
            vmem_limit_bytes=vmem_limit),
    )(a_hat, x, ws, bs, mask_t, wl, bl)


def xw_matmul(x, w, tm, *, vmem_limit):
    np_, f_in = x.shape
    f_out = w.shape[1]
    return pl.pallas_call(
        xw_kernel,
        out_shape=jax.ShapeDtypeStruct((np_, f_out), x.dtype),
        grid_spec=pltpu.PrefetchScalarGridSpec(
            num_scalar_prefetch=0,
            grid=(np_ // tm,),
            in_specs=[pl.BlockSpec((tm, f_in), lambda i: (i, 0)),
                      pl.BlockSpec((f_in, f_out), lambda i: (0, 0))],
            out_specs=pl.BlockSpec((tm, f_out), lambda i: (i, 0))),
        compiler_params=pltpu.CompilerParams(
            dimension_semantics=("parallel",),
            vmem_limit_bytes=vmem_limit),
    )(x, w)


def gcn_aggregate(a_hat, xw, b, tm, tk, *, xw_resident, vmem_limit):
    np_ = a_hat.shape[0]
    f = xw.shape[1]
    if xw_resident:
        kernel = aggregate_resident_kernel
        xw_spec = pl.BlockSpec((np_, f), lambda i, k: (0, 0))   # DMA'd once, resident
    else:
        kernel = aggregate_streamed_kernel
        xw_spec = pl.BlockSpec((tk, f), lambda i, k: (k, 0))
    return pl.pallas_call(
        kernel,
        out_shape=jax.ShapeDtypeStruct((np_, f), xw.dtype),
        grid_spec=pltpu.PrefetchScalarGridSpec(
            num_scalar_prefetch=0,
            grid=(np_ // tm, np_ // tk),        # reduction axis last
            in_specs=[pl.BlockSpec((tm, tk), lambda i, k: (i, k)),
                      xw_spec,
                      pl.BlockSpec((1, f), lambda i, k: (0, 0))],
            out_specs=pl.BlockSpec((tm, f), lambda i, k: (i, 0)),
            scratch_shapes=[pltpu.VMEM((tm, f), jnp.float32)]),
        compiler_params=pltpu.CompilerParams(
            dimension_semantics=("parallel", "arbitrary"),
            vmem_limit_bytes=vmem_limit),
    )(a_hat, xw, b)


def global_max_pool_lin(mask_t, h, wl, bl, tp, *, vmem_limit):
    np_, g = mask_t.shape
    f = h.shape[1]
    pp = wl.shape[1]
    return pl.pallas_call(
        pool_lin_kernel,
        out_shape=jax.ShapeDtypeStruct((g, pp), jnp.float32),
        grid_spec=pltpu.PrefetchScalarGridSpec(
            num_scalar_prefetch=0,
            grid=(np_ // tp,),
            in_specs=[pl.BlockSpec((tp, g), lambda i: (i, 0)),
                      pl.BlockSpec((tp, f), lambda i: (i, 0)),
                      pl.BlockSpec((f, pp), lambda i: (0, 0)),
                      pl.BlockSpec((1, pp), lambda i: (0, 0))],
            out_specs=pl.BlockSpec((g, pp), lambda i: (0, 0)),
            scratch_shapes=[pltpu.VMEM((g, f), jnp.float32)]),
        compiler_params=pltpu.CompilerParams(
            dimension_semantics=("arbitrary",),
            vmem_limit_bytes=vmem_limit),
    )(mask_t, h, wl, bl)


# ------------------------------ JAX glue ----------------------------------- #

def build_normalized_adjacency(edge_index, num_nodes):
    """Dense D^-1/2 (A + remaining self loops) D^-1/2 with A_hat[tgt, src]."""
    row, col = edge_index[0], edge_index[1]        # row = source, col = target
    w = jnp.ones(row.shape, jnp.float32)           # GCNConv default edge weight
    a = jnp.zeros((num_nodes, num_nodes), jnp.float32).at[col, row].add(w)
    # add_remaining_self_loops(fill_value=1.0): only nodes missing a self loop
    has_loop = jnp.zeros((num_nodes,), jnp.float32).at[row].add(
        jnp.where(row == col, 1.0, 0.0)) > 0
    a = a + jnp.diag(jnp.where(has_loop, 0.0, 1.0))
    deg = a.sum(axis=1)
    dis = jnp.where(deg > 0, jax.lax.rsqrt(deg), 0.0)
    return dis[:, None] * a * dis[None, :]


def _prepare_params(params, n_layers, fp, pp, compute_dtype):
    ws = jnp.stack([_pad2d(params["convs"][i][0], fp, fp)
                    for i in range(n_layers)]).astype(compute_dtype)
    bs = jnp.stack([jnp.pad(params["convs"][i][1],
                            (0, fp - params["convs"][i][1].shape[0])).reshape(1, fp)
                    for i in range(n_layers)]).astype(jnp.float32)
    wl = _pad2d(params["lin_w"], fp, pp).astype(jnp.float32)    # head stays f32
    bl = jnp.pad(params["lin_b"], (0, pp - params["lin_b"].shape[0])
                 ).reshape(1, pp).astype(jnp.float32)
    return ws, bs, wl, bl


def gcn_forward(x, edge_index, batch, params, num_graphs, n_layers,
                compute_dtype=jnp.bfloat16, force_tiled=False):
    n, n_f = x.shape
    hidden = params["convs"][0][0].shape[1]
    n_pred = params["lin_w"].shape[1]
    fp = _round_up(max(n_f, hidden), LANE)           # lane-dense feature width
    pp = _round_up(n_pred, LANE)                     # lane-dense head output
    itemsize = jnp.dtype(compute_dtype).itemsize

    vmem_cap = _vmem_capacity_bytes()                # per-generation VMEM budget
    vmem_limit = int(vmem_cap * 0.8)

    ws, bs, wl, bl = _prepare_params(params, n_layers, fp, pp, compute_dtype)

    # ---- fully fused single-call path for small graphs ----------------------
    np_fused = _round_up(n, LANE)
    fused_bytes = (np_fused * np_fused * itemsize            # A_hat
                   + 6 * np_fused * fp * 4                   # x / xw / h temporaries
                   + n_layers * fp * fp * itemsize           # conv weights
                   + np_fused * num_graphs * 4               # membership mask
                   + 2 * fp * pp * 4)                        # head
    if (not force_tiled) and np_fused <= 2048 and fused_bytes <= vmem_cap // 2:
        np_ = np_fused
        a_hat = _pad2d(build_normalized_adjacency(edge_index, n), np_, np_
                       ).astype(compute_dtype)
        batch_pad = jnp.full((np_,), -1, jnp.int32).at[:n].set(batch)
        mask_t = (batch_pad[:, None] == jnp.arange(num_graphs)[None, :]
                  ).astype(jnp.float32)                       # (np_, G), padded=no graph
        x_pad = _pad2d(x.astype(jnp.float32), np_, fp).astype(compute_dtype)
        out = fused_forward(a_hat, x_pad, ws, bs, mask_t, wl, bl,
                            n_layers=n_layers, compute_dtype=compute_dtype,
                            vmem_limit=vmem_limit)
        return out[:, :n_pred]

    # ---- tiled path for large graphs ----------------------------------------
    np_ = _round_up(n, 1024)
    tm = min(512, np_)        # row tile: keeps grid[0] >= 2 for the v7x megacore
    tk = min(1024, np_)       # contraction tile (multiple of 256 for v6e/v7x MXU)
    tp = min(256, np_)        # pool node tile, decoupled from the aggregate tm

    a_hat = _pad2d(build_normalized_adjacency(edge_index, n), np_, np_
                   ).astype(compute_dtype)
    batch_pad = jnp.full((np_,), -1, jnp.int32).at[:n].set(batch)
    mask_t = (batch_pad[:, None] == jnp.arange(num_graphs)[None, :]).astype(jnp.float32)

    # Keep XW VMEM-resident across the whole (row, k) grid when it fits
    # (conservatively counted x2 for pipeline buffers) next to the A tiles.
    resident_bytes = (2 * np_ * fp * itemsize        # XW (resident)
                      + 2 * tm * tk * itemsize       # A_hat tiles (double buffered)
                      + 2 * tm * fp * itemsize       # output tiles
                      + tm * fp * 4 + 2 * fp * 4)    # f32 accumulator + bias
    xw_resident = resident_bytes <= int(vmem_cap * 0.6)

    h = _pad2d(x.astype(jnp.float32), np_, fp).astype(compute_dtype)
    # TODO(synk): multi-layer fusion keeping A_hat VMEM-resident across layers and
    # a blocked-sparse A_hat (PrefetchScalarGridSpec block lists) for large graphs.
    for i in range(n_layers):                        # faithful: only first n_layers convs
        xw = xw_matmul(h, ws[i], tm, vmem_limit=vmem_limit)
        h = gcn_aggregate(a_hat, xw, bs[i], tm, tk,
                          xw_resident=xw_resident, vmem_limit=vmem_limit)

    # F.dropout(p=0.5): identity in eval mode (deterministic forward)
    out = global_max_pool_lin(mask_t, h, wl, bl, tp, vmem_limit=vmem_limit)
    return out[:, :n_pred]


def init_params(key, n_f, hidden_channels, n_hlin, n_pred, n_layers):
    """Deterministic synthetic init matching the shapes created in __init__."""
    params = {"convs": []}
    dims = [n_f] + [hidden_channels] * (n_layers + 1) + [n_hlin]
    # n_layers + 2 GCNConv layers are constructed; forward only uses the first
    # n_layers of them (all are created for shape fidelity).
    for i in range(n_layers + 2):
        f_in, f_out = dims[i], dims[i + 1]
        key, kw = jax.random.split(key)
        scale = jnp.sqrt(6.0 / (f_in + f_out))                 # glorot-uniform
        w = jax.random.uniform(kw, (f_in, f_out), jnp.float32, -scale, scale)
        b = jnp.zeros((f_out,), jnp.float32)
        params["convs"].append((w, b))
    key, kl, kb = jax.random.split(key, 3)
    bound = 1.0 / jnp.sqrt(n_hlin)
    params["lin_w"] = jax.random.uniform(kl, (n_hlin, n_pred), jnp.float32, -bound, bound)
    params["lin_b"] = jax.random.uniform(kb, (n_pred,), jnp.float32, -bound, bound)
    return params


# ------------------------------- reference --------------------------------- #

def gcn_forward_ref(x, edge_index, batch, params, num_graphs, n_layers):
    a_hat = build_normalized_adjacency(edge_index, x.shape[0])
    h = x
    for i in range(n_layers):
        w, b = params["convs"][i]
        h = jnp.maximum(a_hat @ (h @ w) + b[None, :], 0.0)
    mask = batch[None, :] == jnp.arange(num_graphs)[:, None]
    pooled = jnp.where(mask[:, :, None], h[None, :, :], -jnp.inf).max(axis=1)
    return pooled @ params["lin_w"] + params["lin_b"][None, :]


# --------------------------------- main ------------------------------------ #

if __name__ == "__main__":
    # forward() applies lin (n_hlin -> n_pred) to hidden_channels-wide features,
    # so the module only runs when n_hlin == hidden_channels; honor that.
    n_f, hidden_channels, n_layers, n_pred = 8, 32, 2, 4
    n_hlin = hidden_channels
    params = init_params(jax.random.PRNGKey(1), n_f, hidden_channels,
                         n_hlin, n_pred, n_layers)

    def make_graph(key, num_nodes, num_edges, num_graphs):
        kx, ks, kd = jax.random.split(key, 3)
        xg = jax.random.normal(kx, (num_nodes, n_f), jnp.float32)
        src = jax.random.randint(ks, (num_edges,), 0, num_nodes)
        # avoid self loops so add_remaining_self_loops adds them all
        dst = (src + jax.random.randint(kd, (num_edges,), 1, num_nodes)) % num_nodes
        ei = jnp.stack([src, dst]).astype(jnp.int32)
        sizes = [num_nodes // num_graphs] * (num_graphs - 1)
        sizes.append(num_nodes - sum(sizes))
        bt = jnp.concatenate([jnp.full((s,), g, jnp.int32)
                              for g, s in enumerate(sizes)])
        return xg, ei, bt

    key = jax.random.PRNGKey(0)
    k_small, k_large = jax.random.split(key)

    # --- small graph: fully fused single-kernel path -------------------------
    num_nodes, num_edges, num_graphs = 16, 40, 2
    x, edge_index, batch = make_graph(k_small, num_nodes, num_edges, num_graphs)
    ref = gcn_forward_ref(x, edge_index, batch, params, num_graphs, n_layers)

    out_f32 = jax.block_until_ready(
        gcn_forward(x, edge_index, batch, params, num_graphs, n_layers,
                    compute_dtype=jnp.float32))
    assert out_f32.shape == (num_graphs, n_pred)
    assert bool(jnp.allclose(out_f32, ref, atol=1e-4, rtol=1e-4))

    out_bf16 = jax.block_until_ready(
        gcn_forward(x, edge_index, batch, params, num_graphs, n_layers))  # bf16 default
    assert out_bf16.shape == (num_graphs, n_pred)
    assert bool(jnp.allclose(out_bf16, ref, atol=1e-1, rtol=1e-1))

    # --- larger graph: tiled path (resident-XW aggregate, decoupled pool tile) --
    num_nodes2, num_edges2, num_graphs2 = 1200, 4800, 3
    x2, edge_index2, batch2 = make_graph(k_large, num_nodes2, num_edges2, num_graphs2)
    ref2 = gcn_forward_ref(x2, edge_index2, batch2, params, num_graphs2, n_layers)

    out2_f32 = jax.block_until_ready(
        gcn_forward(x2, edge_index2, batch2, params, num_graphs2, n_layers,
                    compute_dtype=jnp.float32, force_tiled=True))
    assert out2_f32.shape == (num_graphs2, n_pred)
    assert bool(jnp.allclose(out2_f32, ref2, atol=1e-3, rtol=1e-3))

    out2_bf16 = jax.block_until_ready(
        gcn_forward(x2, edge_index2, batch2, params, num_graphs2, n_layers,
                    force_tiled=True))
    assert out2_bf16.shape == (num_graphs2, n_pred)
    assert bool(jnp.allclose(out2_bf16, ref2, atol=2e-1, rtol=2e-1))

    print("KERNEL_OK")
</pallas_src>

<mosaic_0001>
module attributes {stable_mosaic.version = 11 : i64} {
  func.func @fused_forward_kernel(%arg0: i32, %arg1: memref<128x128xf32, #tpu.memory_space<vmem>>, %arg2: memref<128x128xf32, #tpu.memory_space<vmem>>, %arg3: memref<2x128x128xf32, #tpu.memory_space<vmem>>, %arg4: memref<2x1x128xf32, #tpu.memory_space<vmem>>, %arg5: memref<128x2xf32, #tpu.memory_space<vmem>>, %arg6: memref<128x128xf32, #tpu.memory_space<vmem>>, %arg7: memref<1x128xf32, #tpu.memory_space<vmem>>, %arg8: memref<2x128xf32, #tpu.memory_space<vmem>>, %arg9: memref<2x128xf32, #tpu.memory_space<vmem>>) attributes {dimension_semantics = [#tpu.dimension_semantics<arbitrary>], iteration_bounds = array<i64: 1>, scalar_prefetch = 0 : i64, scratch_operands = 1 : i64, tpu.core_type = #tpu.core_type<tc>, window_params = [{pipeline_mode = #tpu.pipeline_mode<synchronous>, transform_indices = @transform_0, window_bounds = array<i64: 128, 128>}, {pipeline_mode = #tpu.pipeline_mode<synchronous>, transform_indices = @transform_1, window_bounds = array<i64: 128, 128>}, {pipeline_mode = #tpu.pipeline_mode<synchronous>, transform_indices = @transform_2, window_bounds = array<i64: 2, 128, 128>}, {pipeline_mode = #tpu.pipeline_mode<synchronous>, transform_indices = @transform_3, window_bounds = array<i64: 2, 1, 128>}, {pipeline_mode = #tpu.pipeline_mode<synchronous>, transform_indices = @transform_4, window_bounds = array<i64: 128, 2>}, {pipeline_mode = #tpu.pipeline_mode<synchronous>, transform_indices = @transform_5, window_bounds = array<i64: 128, 128>}, {pipeline_mode = #tpu.pipeline_mode<synchronous>, transform_indices = @transform_6, window_bounds = array<i64: 1, 128>}, {pipeline_mode = #tpu.pipeline_mode<synchronous>, transform_indices = @transform_7, window_bounds = array<i64: 2, 128>}]} {
    %c0 = arith.constant 0 : index
    %c0_0 = arith.constant 0 : index
    %0 = vector.load %arg1[%c0, %c0_0] : memref<128x128xf32, #tpu.memory_space<vmem>>, vector<128x128xf32>
    %c0_1 = arith.constant 0 : index
    %c0_2 = arith.constant 0 : index
    %1 = vector.load %arg2[%c0_1, %c0_2] : memref<128x128xf32, #tpu.memory_space<vmem>>, vector<128x128xf32>
    %c0_3 = arith.constant 0 : index
    %c0_4 = arith.constant 0 : index
    %c0_5 = arith.constant 0 : index
    %2 = vector.load %arg3[%c0_3, %c0_4, %c0_5] : memref<2x128x128xf32, #tpu.memory_space<vmem>>, vector<1x128x128xf32>
    %3 = vector.shape_cast %2 : vector<1x128x128xf32> to vector<128x128xf32>
    %cst = arith.constant dense<0.000000e+00> : vector<128x128xf32>
    %4 = tpu.matmul %1, %3, %cst {dimension_numbers = #tpu.dot_dimension_numbers<[1], [0], [0], [1], [0, 0, 1, 1], [], []>} : vector<128x128xf32>, vector<128x128xf32>, vector<128x128xf32> -> vector<128x128xf32>
    %cst_6 = arith.constant dense<0.000000e+00> : vector<128x128xf32>
    %5 = tpu.matmul %0, %4, %cst_6 {dimension_numbers = #tpu.dot_dimension_numbers<[1], [0], [0], [1], [0, 0, 1, 1], [], []>} : vector<128x128xf32>, vector<128x128xf32>, vector<128x128xf32> -> vector<128x128xf32>
    %c0_7 = arith.constant 0 : index
    %c0_8 = arith.constant 0 : index
    %c0_9 = arith.constant 0 : index
    %6 = vector.load %arg4[%c0_7, %c0_8, %c0_9] : memref<2x1x128xf32, #tpu.memory_space<vmem>>, vector<1x1x128xf32>
    %7 = vector.shape_cast %6 : vector<1x1x128xf32> to vector<1x128xf32>
    %8 = vector.broadcast %7 : vector<1x128xf32> to vector<128x128xf32>
    %9 = arith.addf %5, %8 : vector<128x128xf32>
    %cst_10 = arith.constant 0.000000e+00 : f32
    %10 = vector.broadcast %cst_10 : f32 to vector<128x128xf32>
    %11 = arith.maximumf %9, %10 : vector<128x128xf32>
    %c1 = arith.constant 1 : index
    %c0_11 = arith.constant 0 : index
    %c0_12 = arith.constant 0 : index
    %12 = vector.load %arg3[%c1, %c0_11, %c0_12] : memref<2x128x128xf32, #tpu.memory_space<vmem>>, vector<1x128x128xf32>
    %13 = vector.shape_cast %12 : vector<1x128x128xf32> to vector<128x128xf32>
    %cst_13 = arith.constant dense<0.000000e+00> : vector<128x128xf32>
    %14 = tpu.matmul %11, %13, %cst_13 {dimension_numbers = #tpu.dot_dimension_numbers<[1], [0], [0], [1], [0, 0, 1, 1], [], []>} : vector<128x128xf32>, vector<128x128xf32>, vector<128x128xf32> -> vector<128x128xf32>
    %cst_14 = arith.constant dense<0.000000e+00> : vector<128x128xf32>
    %15 = tpu.matmul %0, %14, %cst_14 {dimension_numbers = #tpu.dot_dimension_numbers<[1], [0], [0], [1], [0, 0, 1, 1], [], []>} : vector<128x128xf32>, vector<128x128xf32>, vector<128x128xf32> -> vector<128x128xf32>
    %c1_15 = arith.constant 1 : index
    %c0_16 = arith.constant 0 : index
    %c0_17 = arith.constant 0 : index
    %16 = vector.load %arg4[%c1_15, %c0_16, %c0_17] : memref<2x1x128xf32, #tpu.memory_space<vmem>>, vector<1x1x128xf32>
    %17 = vector.shape_cast %16 : vector<1x1x128xf32> to vector<1x128xf32>
    %18 = vector.broadcast %17 : vector<1x128xf32> to vector<128x128xf32>
    %19 = arith.addf %15, %18 : vector<128x128xf32>
    %cst_18 = arith.constant 0.000000e+00 : f32
    %20 = vector.broadcast %cst_18 : f32 to vector<128x128xf32>
    %21 = arith.maximumf %19, %20 : vector<128x128xf32>
    %c0_19 = arith.constant 0 : index
    %c0_20 = arith.constant 0 : index
    %22 = vector.load %arg5[%c0_19, %c0_20] : memref<128x2xf32, #tpu.memory_space<vmem>>, vector<128x2xf32>
    %23 = vector.extract_strided_slice %22 {offsets = [0, 0], sizes = [128, 1], strides = [1, 1]} : vector<128x2xf32> to vector<128x1xf32>
    %cst_21 = arith.constant 5.000000e-01 : f32
    %24 = vector.broadcast %cst_21 : f32 to vector<128x1xf32>
    %25 = arith.cmpf ogt, %23, %24 : vector<128x1xf32>
    %cst_22 = arith.constant 0xFF800000 : f32
    %26 = vector.shape_cast %25 : vector<128x1xi1> to vector<128x1xi1>
    %27 = vector.broadcast %26 : vector<128x1xi1> to vector<128x128xi1>
    %28 = vector.broadcast %cst_22 : f32 to vector<128x128xf32>
    %29 = arith.select %27, %21, %28 : vector<128x128xi1>, vector<128x128xf32>
    %cst_23 = arith.constant dense<0xFF800000> : vector<128xf32>
    %30 = vector.multi_reduction <maximumf>, %29, %cst_23 [0] : vector<128x128xf32> to vector<128xf32>
    %31 = vector.shape_cast %30 : vector<128xf32> to vector<1x128xf32>
    %32 = vector.extract_strided_slice %22 {offsets = [0, 1], sizes = [128, 1], strides = [1, 1]} : vector<128x2xf32> to vector<128x1xf32>
    %cst_24 = arith.constant 5.000000e-01 : f32
    %33 = vector.broadcast %cst_24 : f32 to vector<128x1xf32>
    %34 = arith.cmpf ogt, %32, %33 : vector<128x1xf32>
    %cst_25 = arith.constant 0xFF800000 : f32
    %35 = vector.shape_cast %34 : vector<128x1xi1> to vector<128x1xi1>
    %36 = vector.broadcast %35 : vector<128x1xi1> to vector<128x128xi1>
    %37 = vector.broadcast %cst_25 : f32 to vector<128x128xf32>
    %38 = arith.select %36, %21, %37 : vector<128x128xi1>, vector<128x128xf32>
    %cst_26 = arith.constant dense<0xFF800000> : vector<128xf32>
    %39 = vector.multi_reduction <maximumf>, %38, %cst_26 [0] : vector<128x128xf32> to vector<128xf32>
    %40 = vector.shape_cast %39 : vector<128xf32> to vector<1x128xf32>
    %c0_27 = arith.constant 0 : index
    %c0_28 = arith.constant 0 : index
    %41 = vector.load %arg9[%c0_27, %c0_28] : memref<2x128xf32, #tpu.memory_space<vmem>>, vector<1x128xf32>
    tpu.vector_store %arg9[%c0_27, %c0_28], %31 {strides = array<i32>} : memref<2x128xf32, #tpu.memory_space<vmem>>, vector<1x128xf32>,
    %c1_29 = arith.constant 1 : index
    %c0_30 = arith.constant 0 : index
    %42 = vector.load %arg9[%c1_29, %c0_30] : memref<2x128xf32, #tpu.memory_space<vmem>>, vector<1x128xf32>
    tpu.vector_store %arg9[%c1_29, %c0_30], %40 {strides = array<i32>} : memref<2x128xf32, #tpu.memory_space<vmem>>, vector<1x128xf32>,
    %c0_31 = arith.constant 0 : index
    %c0_32 = arith.constant 0 : index
    %43 = vector.load %arg9[%c0_31, %c0_32] : memref<2x128xf32, #tpu.memory_space<vmem>>, vector<2x128xf32>
    %c0_33 = arith.constant 0 : index
    %c0_34 = arith.constant 0 : index
    %44 = vector.load %arg6[%c0_33, %c0_34] : memref<128x128xf32, #tpu.memory_space<vmem>>, vector<128x128xf32>
    %cst_35 = arith.constant dense<0.000000e+00> : vector<2x128xf32>
    %45 = tpu.matmul %43, %44, %cst_35 {dimension_numbers = #tpu.dot_dimension_numbers<[1], [0], [0], [1], [0, 0, 1, 1], [], []>} : vector<2x128xf32>, vector<128x128xf32>, vector<2x128xf32> -> vector<2x128xf32>
    %c0_36 = arith.constant 0 : index
    %c0_37 = arith.constant 0 : index
    %46 = vector.load %arg7[%c0_36, %c0_37] : memref<1x128xf32, #tpu.memory_space<vmem>>, vector<1x128xf32>
    %47 = vector.broadcast %46 : vector<1x128xf32> to vector<2x128xf32>
    %48 = arith.addf %45, %47 : vector<2x128xf32>
    %c0_38 = arith.constant 0 : index
    %c0_39 = arith.constant 0 : index
    %49 = vector.load %arg8[%c0_38, %c0_39] : memref<2x128xf32, #tpu.memory_space<vmem>>, vector<2x128xf32>
    tpu.vector_store %arg8[%c0_38, %c0_39], %48 {strides = array<i32>} : memref<2x128xf32, #tpu.memory_space<vmem>>, vector<2x128xf32>,
    return
  }
  func.func @transform_0(%arg0: i32) -> (i32, i32) {
    %c0_i32 = arith.constant 0 : i32
    %c0_i32_0 = arith.constant 0 : i32
    %c0_i32_1 = arith.constant 0 : i32
    return %c0_i32, %c0_i32_0 : i32, i32
  }
  func.func @transform_1(%arg0: i32) -> (i32, i32) {
    %c0_i32 = arith.constant 0 : i32
    %c0_i32_0 = arith.constant 0 : i32
    %c0_i32_1 = arith.constant 0 : i32
    return %c0_i32, %c0_i32_0 : i32, i32
  }
  func.func @transform_2(%arg0: i32) -> (i32, i32, i32) {
    %c0_i32 = arith.constant 0 : i32
    %c0_i32_0 = arith.constant 0 : i32
    %c0_i32_1 = arith.constant 0 : i32
    %c0_i32_2 = arith.constant 0 : i32
    return %c0_i32, %c0_i32_0, %c0_i32_1 : i32, i32, i32
  }
  func.func @transform_3(%arg0: i32) -> (i32, i32, i32) {
    %c0_i32 = arith.constant 0 : i32
    %c0_i32_0 = arith.constant 0 : i32
    %c0_i32_1 = arith.constant 0 : i32
    %c0_i32_2 = arith.constant 0 : i32
    return %c0_i32, %c0_i32_0, %c0_i32_1 : i32, i32, i32
  }
  func.func @transform_4(%arg0: i32) -> (i32, i32) {
    %c0_i32 = arith.constant 0 : i32
    %c0_i32_0 = arith.constant 0 : i32
    %c0_i32_1 = arith.constant 0 : i32
    return %c0_i32, %c0_i32_0 : i32, i32
  }
  func.func @transform_5(%arg0: i32) -> (i32, i32) {
    %c0_i32 = arith.constant 0 : i32
    %c0_i32_0 = arith.constant 0 : i32
    %c0_i32_1 = arith.constant 0 : i32
    return %c0_i32, %c0_i32_0 : i32, i32
  }
  func.func @transform_6(%arg0: i32) -> (i32, i32) {
    %c0_i32 = arith.constant 0 : i32
    %c0_i32_0 = arith.constant 0 : i32
    %c0_i32_1 = arith.constant 0 : i32
    return %c0_i32, %c0_i32_0 : i32, i32
  }
  func.func @transform_7(%arg0: i32) -> (i32, i32) {
    %c0_i32 = arith.constant 0 : i32
    %c0_i32_0 = arith.constant 0 : i32
    %c0_i32_1 = arith.constant 0 : i32
    return %c0_i32, %c0_i32_0 : i32, i32
  }
}

</mosaic_0001>

<llo_original>
// kernel: tpu_custom_call.1
$region0: #{tpu_custom_call.1}
  #allocation0 [shape = 'u32[]', space=smem, size = 0x4, offset = 0x4, fixed_abs, tag = 'smem constant byte address 0x4 - core index']
  #allocation1 [shape = 'u32[144,128]{1,0:T(1,128)}', space=vmem, size = 0x12000, scoped, tag = 'internal scratch']
  #allocation2 [shape = 'f32[2,128]{1,0:T(2,128)}', space=vmem, size = 0x400, scoped, tag = 'scratch operand']
  %s0 = inlined_call_operand.vmem [shape: f32[128,128], index: 0, kind: input, shape index: {}]
  %s1 = inlined_call_operand.hbm [shape: f32[128,128], index: 1, kind: input, shape index: {}]
  %s2 = inlined_call_operand.hbm [shape: f32[2,128,128], index: 2, kind: input, shape index: {}]
  %s3 = inlined_call_operand.vmem [shape: f32[2,1,128], index: 3, kind: input, shape index: {}]
  %s4 = inlined_call_operand.vmem [shape: f32[128,2], index: 4, kind: input, shape index: {}]
  %s5 = inlined_call_operand.hbm [shape: f32[128,128], index: 5, kind: input, shape index: {}]
  %s6 = inlined_call_operand.vmem [shape: f32[1,128], index: 6, kind: input, shape index: {}]
  %s7 = inlined_call_operand.hbm [shape: f32[2,128], index: 7, kind: output, shape index: {}]
  %s8 = sld [smem:[#allocation0]]
  $region50: #{tpu_custom_call.1} parent=0
    _
  %s10 = ssub.s32 1, %s8
  %s11 = scalar_select 0, %s10, %s8
  $region1: #{tpu_custom_call.1} parent=0
    #allocation3 [shape = 'u8[65536]{0}', space=vmem, size = 0x10000, scoped, tag = 'input window, operand 1, single buffered']
    #allocation4 [shape = 's32[1]{0}', space=sflag, size = 0x4, scoped, tag = 'scoped memory for tpu_custom_call.1']
    #allocation5 [shape = 's32[1]{0}', space=sflag, size = 0x4, scoped, tag = 'scoped memory for tpu_custom_call.1']
    #allocation6 [shape = 'u8[131072]{0}', space=vmem, size = 0x20000, scoped, tag = 'input window, operand 2, single buffered']
    #allocation7 [shape = 's32[1]{0}', space=sflag, size = 0x4, scoped, tag = 'scoped memory for tpu_custom_call.1']
    #allocation8 [shape = 'u8[65536]{0}', space=vmem, size = 0x10000, scoped, tag = 'input window, operand 5, single buffered']
    #allocation9 [shape = 'u8[1024]{0}', space=vmem, size = 0x400, scoped, tag = 'output window, operand 0, single buffered']
    %12 = vsyncpa [#allocation4], 0
    %13 = vsyncpa [#allocation7], 0
    %14 = vsyncpa [#allocation5], 0
    // Predicated region
    $region2: #{tpu_custom_call.1} parent=1 // pred_check
      _
    $region3: #{tpu_custom_call.1} parent=1 // pred_check_branch
      %16 = sbr.rel (0) target = $region5
    $region4: #{tpu_custom_call.1} parent=1 // pred_region
      _
    $region5: #{tpu_custom_call.1} parent=1 // pred_fallthru
      _
    // Predicated region
    $region6: #{tpu_custom_call.1} parent=1 // pred_check
      _
    $region7: #{tpu_custom_call.1} parent=1 // pred_check_branch
      %18 = sbr.rel (0) target = $region9
    $region8: #{tpu_custom_call.1} parent=1 // pred_region
      %s20 = ssub.s32 2048, 2048
      %21 = vsyncadd [#allocation4], %s20
      %s22 = sshll.u32 [#allocation3], 4
      %s23 = int_to_ptr.vmem [resolvable:$true] %s22
      %28 = dma.hbm_to_vmem [thread:$0]  %s1, 2048, %s23, [#allocation4], 128, 128, 8
    $region9: #{tpu_custom_call.1} parent=1 // pred_fallthru
      _
    // Predicated region
    $region10: #{tpu_custom_call.1} parent=1 // pred_check
      _
    $region11: #{tpu_custom_call.1} parent=1 // pred_check_branch
      %30 = sbr.rel (0) target = $region13
    $region12: #{tpu_custom_call.1} parent=1 // pred_region
      %s32 = ssub.s32 4096, 4096
      %33 = vsyncadd [#allocation7], %s32
      %s34 = sshll.u32 [#allocation6], 4
      %s35 = int_to_ptr.vmem [resolvable:$true] %s34
      %40 = dma.hbm_to_vmem [thread:$0]  %s2, 4096, %s35, [#allocation7], 128, 128, 8
    $region13: #{tpu_custom_call.1} parent=1 // pred_fallthru
      _
    // Predicated region
    $region14: #{tpu_custom_call.1} parent=1 // pred_check
      _
    $region15: #{tpu_custom_call.1} parent=1 // pred_check_branch
      %42 = sbr.rel (0) target = $region17
    $region16: #{tpu_custom_call.1} parent=1 // pred_region
      _
    $region17: #{tpu_custom_call.1} parent=1 // pred_fallthru
      _
    // Predicated region
    $region18: #{tpu_custom_call.1} parent=1 // pred_check
      _
    $region19: #{tpu_custom_call.1} parent=1 // pred_check_branch
      %44 = sbr.rel (0) target = $region21
    $region20: #{tpu_custom_call.1} parent=1 // pred_region
      _
    $region21: #{tpu_custom_call.1} parent=1 // pred_fallthru
      _
    // Predicated region
    $region22: #{tpu_custom_call.1} parent=1 // pred_check
      _
    $region23: #{tpu_custom_call.1} parent=1 // pred_check_branch
      %46 = sbr.rel (0) target = $region25
    $region24: #{tpu_custom_call.1} parent=1 // pred_region
      %s48 = ssub.s32 2048, 2048
      %49 = vsyncadd [#allocation7], %s48
      %s50 = sshll.u32 [#allocation8], 4
      %s51 = int_to_ptr.vmem [resolvable:$true] %s50
      %56 = dma.hbm_to_vmem [thread:$0]  %s5, 2048, %s51, [#allocation7], 128, 128, 8
    $region25: #{tpu_custom_call.1} parent=1 // pred_fallthru
      _
    // Predicated region
    $region26: #{tpu_custom_call.1} parent=1 // pred_check
      _
    $region27: #{tpu_custom_call.1} parent=1 // pred_check_branch
      %58 = sbr.rel (0) target = $region29
    $region28: #{tpu_custom_call.1} parent=1 // pred_region
      _
    $region29: #{tpu_custom_call.1} parent=1 // pred_fallthru
      _
    // Predicated region
    $region30: #{tpu_custom_call.1} parent=1 // pred_check
      _
    $region31: #{tpu_custom_call.1} parent=1 // pred_check_branch
      %60 = sbr.rel (0) target = $region33
    $region32: #{tpu_custom_call.1} parent=1 // pred_region
      %61 = dma.done [#allocation4], 2048
    $region33: #{tpu_custom_call.1} parent=1 // pred_fallthru
      _
    // Predicated region
    $region34: #{tpu_custom_call.1} parent=1 // pred_check
      _
    $region35: #{tpu_custom_call.1} parent=1 // pred_check_branch
      %63 = sbr.rel (0) target = $region37
    $region36: #{tpu_custom_call.1} parent=1 // pred_region
      %64 = dma.done [#allocation7], 4096
    $region37: #{tpu_custom_call.1} parent=1 // pred_fallthru
      _
    // Predicated region
    $region38: #{tpu_custom_call.1} parent=1 // pred_check
      _
    $region39: #{tpu_custom_call.1} parent=1 // pred_check_branch
      %66 = sbr.rel (0) target = $region41
    $region40: #{tpu_custom_call.1} parent=1 // pred_region
      %67 = dma.done [#allocation7], 2048
    $region41: #{tpu_custom_call.1} parent=1 // pred_fallthru
      _
    %v68 = vld [vmem:[%s0] sm:$0xff]
    %v69 = vld [vmem:[%s0 + $0x8] sm:$0xff]
    %v70 = vld [vmem:[%s0 + $0x10] sm:$0xff]
    %v71 = vld [vmem:[%s0 + $0x18] sm:$0xff]
    %v72 = vld [vmem:[%s0 + $0x20] sm:$0xff]
    %v73 = vld [vmem:[%s0 + $0x28] sm:$0xff]
    %v74 = vld [vmem:[%s0 + $0x30] sm:$0xff]
    %v75 = vld [vmem:[%s0 + $0x38] sm:$0xff]
    %v76 = vld [vmem:[%s0 + $0x40] sm:$0xff]
    %v77 = vld [vmem:[%s0 + $0x48] sm:$0xff]
    %v78 = vld [vmem:[%s0 + $0x50] sm:$0xff]
    %v79 = vld [vmem:[%s0 + $0x58] sm:$0xff]
    %v80 = vld [vmem:[%s0 + $0x60] sm:$0xff]
    %v81 = vld [vmem:[%s0 + $0x68] sm:$0xff]
    %v82 = vld [vmem:[%s0 + $0x70] sm:$0xff]
    %v83 = vld [vmem:[%s0 + $0x78] sm:$0xff]
    %v84 = vld [vmem:[#allocation3] sm:$0xff]
    %v85 = vld [vmem:[#allocation3 + $0x8] sm:$0xff]
    %v86 = vld [vmem:[#allocation3 + $0x10] sm:$0xff]
    %v87 = vld [vmem:[#allocation3 + $0x18] sm:$0xff]
    %v88 = vld [vmem:[#allocation3 + $0x20] sm:$0xff]
    %v89 = vld [vmem:[#allocation3 + $0x28] sm:$0xff]
    %v90 = vld [vmem:[#allocation3 + $0x30] sm:$0xff]
    %v91 = vld [vmem:[#allocation3 + $0x38] sm:$0xff]
    %v92 = vld [vmem:[#allocation3 + $0x40] sm:$0xff]
    %v93 = vld [vmem:[#allocation3 + $0x48] sm:$0xff]
    %v94 = vld [vmem:[#allocation3 + $0x50] sm:$0xff]
    %v95 = vld [vmem:[#allocation3 + $0x58] sm:$0xff]
    %v96 = vld [vmem:[#allocation3 + $0x60] sm:$0xff]
    %v97 = vld [vmem:[#allocation3 + $0x68] sm:$0xff]
    %v98 = vld [vmem:[#allocation3 + $0x70] sm:$0xff]
    %v99 = vld [vmem:[#allocation3 + $0x78] sm:$0xff]
    %v100 = vld [vmem:[#allocation6] sm:$0xff]
    %v101 = vld [vmem:[#allocation6 + $0x8] sm:$0xff]
    %v102 = vld [vmem:[#allocation6 + $0x10] sm:$0xff]
    %v103 = vld [vmem:[#allocation6 + $0x18] sm:$0xff]
    %v104 = vld [vmem:[#allocation6 + $0x20] sm:$0xff]
    %v105 = vld [vmem:[#allocation6 + $0x28] sm:$0xff]
    %v106 = vld [vmem:[#allocation6 + $0x30] sm:$0xff]
    %v107 = vld [vmem:[#allocation6 + $0x38] sm:$0xff]
    %v108 = vld [vmem:[#allocation6 + $0x40] sm:$0xff]
    %v109 = vld [vmem:[#allocation6 + $0x48] sm:$0xff]
    %v110 = vld [vmem:[#allocation6 + $0x50] sm:$0xff]
    %v111 = vld [vmem:[#allocation6 + $0x58] sm:$0xff]
    %v112 = vld [vmem:[#allocation6 + $0x60] sm:$0xff]
    %v113 = vld [vmem:[#allocation6 + $0x68] sm:$0xff]
    %v114 = vld [vmem:[#allocation6 + $0x70] sm:$0xff]
    %v115 = vld [vmem:[#allocation6 + $0x78] sm:$0xff]
    %116 = vmatprep.subr.mxu0 0.0
    %117 = vmatpush1.msra.mxu0 %v100
    %118 = vmatprep.subr.mxu0 0.0
    %119 = vmatpush1.msra.mxu0 %v101
    %120 = vmatprep.subr.mxu0 0.0
    %121 = vmatpush1.msra.mxu0 %v102
    %122 = vmatprep.subr.mxu0 0.0
    %123 = vmatpush1.msra.mxu0 %v103
    %124 = vmatprep.subr.mxu0 0.0
    %125 = vmatpush1.msra.mxu0 %v104
    %126 = vmatprep.subr.mxu0 0.0
    %127 = vmatpush1.msra.mxu0 %v105
    %128 = vmatprep.subr.mxu0 0.0
    %129 = vmatpush1.msra.mxu0 %v106
    %130 = vmatprep.subr.mxu0 0.0
    %131 = vmatpush1.msra.mxu0 %v107
    %132 = vmatprep.subr.mxu0 0.0
    %133 = vmatpush1.msra.mxu0 %v108
    %134 = vmatprep.subr.mxu0 0.0
    %135 = vmatpush1.msra.mxu0 %v109
    %136 = vmatprep.subr.mxu0 0.0
    %137 = vmatpush1.msra.mxu0 %v110
    %138 = vmatprep.subr.mxu0 0.0
    %139 = vmatpush1.msra.mxu0 %v111
    %140 = vmatprep.subr.mxu0 0.0
    %141 = vmatpush1.msra.mxu0 %v112
    %142 = vmatprep.subr.mxu0 0.0
    %143 = vmatpush1.msra.mxu0 %v113
    %144 = vmatprep.subr.mxu0 0.0
    %145 = vmatpush1.msra.mxu0 %v114
    %146 = vmatprep.subr.mxu0 0.0
    %147 = vmatpush1.msra.mxu0 %v115
    %148 = vmatprep.subr.mxu0 0.0
    %149 = vmatpush1.msra.mxu0 0.0
    %150 = vmatprep.subr.mxu0 0.0
    %151 = vmatpush1.msra.mxu0 0.0
    %152 = vmatprep.subr.mxu0 0.0
    %153 = vmatpush1.msra.mxu0 0.0
    %154 = vmatprep.subr.mxu0 0.0
    %155 = vmatpush1.msra.mxu0 0.0
    %156 = vmatprep.subr.mxu0 0.0
    %157 = vmatpush1.msra.mxu0 0.0
    %158 = vmatprep.subr.mxu0 0.0
    %159 = vmatpush1.msra.mxu0 0.0
    %160 = vmatprep.subr.mxu0 0.0
    %161 = vmatpush1.msra.mxu0 0.0
    %162 = vmatprep.subr.mxu0 0.0
    %163 = vmatpush1.msra.mxu0 0.0
    %164 = vmatprep.subr.mxu0 0.0
    %165 = vmatpush1.msra.mxu0 0.0
    %166 = vmatprep.subr.mxu0 0.0
    %167 = vmatpush1.msra.mxu0 0.0
    %168 = vmatprep.subr.mxu0 0.0
    %169 = vmatpush1.msra.mxu0 0.0
    %170 = vmatprep.subr.mxu0 0.0
    %171 = vmatpush1.msra.mxu0 0.0
    %172 = vmatprep.subr.mxu0 0.0
    %173 = vmatpush1.msra.mxu0 0.0
    %174 = vmatprep.subr.mxu0 0.0
    %175 = vmatpush1.msra.mxu0 0.0
    %176 = vmatprep.subr.mxu0 0.0
    %177 = vmatpush1.msra.mxu0 0.0
    %178 = vmatprep.subr.mxu0 0.0
    %179 = vmatpush1.msra.mxu0 0.0
    %180 = vmatprep.mubr.f32.mxu0 0.0
    %181 = vmatmul.mubr.f32.gmra.mrb[0].mxu0 %v84
    %v182 = vpop.f32.mrb[0].mxu0
    %v183 = vadd.f32 0.0, %v182
    %v184 = vpop.f32.mrb[0].mxu0
    %185 = vmatprep.mubr.f32.mxu0 0.0
    %186 = vmatmul.mubr.f32.gmra.mrb[0].mxu0 %v85
    %v187 = vpop.f32.mrb[0].mxu0
    %v188 = vadd.f32 0.0, %v187
    %v189 = vpop.f32.mrb[0].mxu0
    %190 = vmatprep.mubr.f32.mxu0 0.0
    %191 = vmatmul.mubr.f32.gmra.mrb[0].mxu0 %v86
    %v192 = vpop.f32.mrb[0].mxu0
    %v193 = vadd.f32 0.0, %v192
    %v194 = vpop.f32.mrb[0].mxu0
    %195 = vmatprep.mubr.f32.mxu0 0.0
    %196 = vmatmul.mubr.f32.gmra.mrb[0].mxu0 %v87
    %v197 = vpop.f32.mrb[0].mxu0
    %v198 = vadd.f32 0.0, %v197
    %v199 = vpop.f32.mrb[0].mxu0
    %200 = vmatprep.mubr.f32.mxu0 0.0
    %201 = vmatmul.mubr.f32.gmra.mrb[0].mxu0 %v88
    %v202 = vpop.f32.mrb[0].mxu0
    %v203 = vadd.f32 0.0, %v202
    %v204 = vpop.f32.mrb[0].mxu0
    %205 = vmatprep.mubr.f32.mxu0 0.0
    %206 = vmatmul.mubr.f32.gmra.mrb[0].mxu0 %v89
    %v207 = vpop.f32.mrb[0].mxu0
    %v208 = vadd.f32 0.0, %v207
    %v209 = vpop.f32.mrb[0].mxu0
    %210 = vmatprep.mubr.f32.mxu0 0.0
    %211 = vmatmul.mubr.f32.gmra.mrb[0].mxu0 %v90
    %v212 = vpop.f32.mrb[0].mxu0
    %v213 = vadd.f32 0.0, %v212
    %v214 = vpop.f32.mrb[0].mxu0
    %215 = vmatprep.mubr.f32.mxu0 0.0
    %216 = vmatmul.mubr.f32.gmra.mrb[0].mxu0 %v91
    %v217 = vpop.f32.mrb[0].mxu0
    %v218 = vadd.f32 0.0, %v217
    %v219 = vpop.f32.mrb[0].mxu0
    %220 = vmatprep.mubr.f32.mxu0 0.0
    %221 = vmatmul.mubr.f32.gmra.mrb[0].mxu0 %v92
    %v222 = vpop.f32.mrb[0].mxu0
    %v223 = vadd.f32 0.0, %v222
    %v224 = vpop.f32.mrb[0].mxu0
    %225 = vmatprep.mubr.f32.mxu0 0.0
    %226 = vmatmul.mubr.f32.gmra.mrb[0].mxu0 %v93
    %v227 = vpop.f32.mrb[0].mxu0
    %v228 = vadd.f32 0.0, %v227
    %v229 = vpop.f32.mrb[0].mxu0
    %230 = vmatprep.mubr.f32.mxu0 0.0
    %231 = vmatmul.mubr.f32.gmra.mrb[0].mxu0 %v94
    %v232 = vpop.f32.mrb[0].mxu0
    %v233 = vadd.f32 0.0, %v232
    %v234 = vpop.f32.mrb[0].mxu0
    %235 = vmatprep.mubr.f32.mxu0 0.0
    %236 = vmatmul.mubr.f32.gmra.mrb[0].mxu0 %v95
    %v237 = vpop.f32.mrb[0].mxu0
    %v238 = vadd.f32 0.0, %v237
    %v239 = vpop.f32.mrb[0].mxu0
    %240 = vmatprep.mubr.f32.mxu0 0.0
    %241 = vmatmul.mubr.f32.gmra.mrb[0].mxu0 %v96
    %v242 = vpop.f32.mrb[0].mxu0
    %v243 = vadd.f32 0.0, %v242
    %v244 = vpop.f32.mrb[0].mxu0
    %245 = vmatprep.mubr.f32.mxu0 0.0
    %246 = vmatmul.mubr.f32.gmra.mrb[0].mxu0 %v97
    %v247 = vpop.f32.mrb[0].mxu0
    %v248 = vadd.f32 0.0, %v247
    %v249 = vpop.f32.mrb[0].mxu0
    %250 = vmatprep.mubr.f32.mxu0 0.0
    %251 = vmatmul.mubr.f32.gmra.mrb[0].mxu0 %v98
    %v252 = vpop.f32.mrb[0].mxu0
    %v253 = vadd.f32 0.0, %v252
    %v254 = vpop.f32.mrb[0].mxu0
    %255 = vmatprep.mubr.f32.mxu0 0.0
    %256 = vmatmul.mubr.f32.gmra.mrb[0].mxu0 %v99
    %v257 = vpop.f32.mrb[0].mxu0
    %v258 = vadd.f32 0.0, %v257
    %v259 = vpop.f32.mrb[0].mxu0
    %260 = vdwg.mxu0
    %v261 = vld [vmem:[%s3] sm:$0x1]
    %v263 = vlaneseq
    %v264 = vshrl.u32 %v263, 7
    %v265 = vsub.s32 0, %v264
    %v266 = vrot.slane %v261, %v265
    %268 = vmatprep.subr.mxu0 0.0
    %269 = vmatpush1.msra.mxu0 %v183
    %270 = vmatprep.subr.mxu0 0.0
    %271 = vmatpush1.msra.mxu0 %v188
    %272 = vmatprep.subr.mxu0 0.0
    %273 = vmatpush1.msra.mxu0 %v193
    %274 = vmatprep.subr.mxu0 0.0
    %275 = vmatpush1.msra.mxu0 %v198
    %276 = vmatprep.subr.mxu0 0.0
    %277 = vmatpush1.msra.mxu0 %v203
    %278 = vmatprep.subr.mxu0 0.0
    %279 = vmatpush1.msra.mxu0 %v208
    %280 = vmatprep.subr.mxu0 0.0
    %281 = vmatpush1.msra.mxu0 %v213
    %282 = vmatprep.subr.mxu0 0.0
    %283 = vmatpush1.msra.mxu0 %v218
    %284 = vmatprep.subr.mxu0 0.0
    %285 = vmatpush1.msra.mxu0 %v223
    %286 = vmatprep.subr.mxu0 0.0
    %287 = vmatpush1.msra.mxu0 %v228
    %288 = vmatprep.subr.mxu0 0.0
    %289 = vmatpush1.msra.mxu0 %v233
    %290 = vmatprep.subr.mxu0 0.0
    %291 = vmatpush1.msra.mxu0 %v238
    %292 = vmatprep.subr.mxu0 0.0
    %293 = vmatpush1.msra.mxu0 %v243
    %294 = vmatprep.subr.mxu0 0.0
    %295 = vmatpush1.msra.mxu0 %v248
    %296 = vmatprep.subr.mxu0 0.0
    %297 = vmatpush1.msra.mxu0 %v253
    %298 = vmatprep.subr.mxu0 0.0
    %299 = vmatpush1.msra.mxu0 %v258
    %300 = vmatprep.subr.mxu0 0.0
    %301 = vmatpush1.msra.mxu0 0.0
    %302 = vmatprep.subr.mxu0 0.0
    %303 = vmatpush1.msra.mxu0 0.0
    %304 = vmatprep.subr.mxu0 0.0
    %305 = vmatpush1.msra.mxu0 0.0
    %306 = vmatprep.subr.mxu0 0.0
    %307 = vmatpush1.msra.mxu0 0.0
    %308 = vmatprep.subr.mxu0 0.0
    %309 = vmatpush1.msra.mxu0 0.0
    %310 = vmatprep.subr.mxu0 0.0
    %311 = vmatpush1.msra.mxu0 0.0
    %312 = vmatprep.subr.mxu0 0.0
    %313 = vmatpush1.msra.mxu0 0.0
    %314 = vmatprep.subr.mxu0 0.0
    %315 = vmatpush1.msra.mxu0 0.0
    %316 = vmatprep.subr.mxu0 0.0
    %317 = vmatpush1.msra.mxu0 0.0
    %318 = vmatprep.subr.mxu0 0.0
    %319 = vmatpush1.msra.mxu0 0.0
    %320 = vmatprep.subr.mxu0 0.0
    %321 = vmatpush1.msra.mxu0 0.0
    %322 = vmatprep.subr.mxu0 0.0
    %323 = vmatpush1.msra.mxu0 0.0
    %324 = vmatprep.subr.mxu0 0.0
    %325 = vmatpush1.msra.mxu0 0.0
    %326 = vmatprep.subr.mxu0 0.0
    %327 = vmatpush1.msra.mxu0 0.0
    %328 = vmatprep.subr.mxu0 0.0
    %329 = vmatpush1.msra.mxu0 0.0
    %330 = vmatprep.subr.mxu0 0.0
    %331 = vmatpush1.msra.mxu0 0.0
    %332 = vmatprep.mubr.f32.mxu0 0.0
    %333 = vmatmul.mubr.f32.gmra.mrb[0].mxu0 %v68
    %v334 = vpop.f32.mrb[0].mxu0
    %v335 = vadd.f32 %v266, %v334
    %v336 = vpop.f32.mrb[0].mxu0
    %337 = vmatprep.mubr.f32.mxu0 0.0
    %338 = vmatmul.mubr.f32.gmra.mrb[0].mxu0 %v69
    %v339 = vpop.f32.mrb[0].mxu0
    %v340 = vadd.f32 %v266, %v339
    %v341 = vpop.f32.mrb[0].mxu0
    %342 = vmatprep.mubr.f32.mxu0 0.0
    %343 = vmatmul.mubr.f32.gmra.mrb[0].mxu0 %v70
    %v344 = vpop.f32.mrb[0].mxu0
    %v345 = vadd.f32 %v266, %v344
    %v346 = vpop.f32.mrb[0].mxu0
    %347 = vmatprep.mubr.f32.mxu0 0.0
    %348 = vmatmul.mubr.f32.gmra.mrb[0].mxu0 %v71
    %v349 = vpop.f32.mrb[0].mxu0
    %v350 = vadd.f32 %v266, %v349
    %v351 = vpop.f32.mrb[0].mxu0
    %352 = vmatprep.mubr.f32.mxu0 0.0
    %353 = vmatmul.mubr.f32.gmra.mrb[0].mxu0 %v72
    %v354 = vpop.f32.mrb[0].mxu0
    %v355 = vadd.f32 %v266, %v354
    %v356 = vpop.f32.mrb[0].mxu0
    %357 = vmatprep.mubr.f32.mxu0 0.0
    %358 = vmatmul.mubr.f32.gmra.mrb[0].mxu0 %v73
    %v359 = vpop.f32.mrb[0].mxu0
    %v360 = vadd.f32 %v266, %v359
    %v361 = vpop.f32.mrb[0].mxu0
    %362 = vmatprep.mubr.f32.mxu0 0.0
    %363 = vmatmul.mubr.f32.gmra.mrb[0].mxu0 %v74
    %v364 = vpop.f32.mrb[0].mxu0
    %v365 = vadd.f32 %v266, %v364
    %v366 = vpop.f32.mrb[0].mxu0
    %367 = vmatprep.mubr.f32.mxu0 0.0
    %368 = vmatmul.mubr.f32.gmra.mrb[0].mxu0 %v75
    %v369 = vpop.f32.mrb[0].mxu0
    %v370 = vadd.f32 %v266, %v369
    %v371 = vpop.f32.mrb[0].mxu0
    %372 = vmatprep.mubr.f32.mxu0 0.0
    %373 = vmatmul.mubr.f32.gmra.mrb[0].mxu0 %v76
    %v374 = vpop.f32.mrb[0].mxu0
    %v375 = vadd.f32 %v266, %v374
    %v376 = vpop.f32.mrb[0].mxu0
    %377 = vmatprep.mubr.f32.mxu0 0.0
    %378 = vmatmul.mubr.f32.gmra.mrb[0].mxu0 %v77
    %v379 = vpop.f32.mrb[0].mxu0
    %v380 = vadd.f32 %v266, %v379
    %v381 = vpop.f32.mrb[0].mxu0
    %382 = vmatprep.mubr.f32.mxu0 0.0
    %383 = vmatmul.mubr.f32.gmra.mrb[0].mxu0 %v78
    %v384 = vpop.f32.mrb[0].mxu0
    %v385 = vadd.f32 %v266, %v384
    %v386 = vpop.f32.mrb[0].mxu0
    %387 = vmatprep.mubr.f32.mxu0 0.0
    %388 = vmatmul.mubr.f32.gmra.mrb[0].mxu0 %v79
    %v389 = vpop.f32.mrb[0].mxu0
    %v390 = vadd.f32 %v266, %v389
    %v391 = vpop.f32.mrb[0].mxu0
    %392 = vmatprep.mubr.f32.mxu0 0.0
    %393 = vmatmul.mubr.f32.gmra.mrb[0].mxu0 %v80
    %v394 = vpop.f32.mrb[0].mxu0
    %v395 = vadd.f32 %v266, %v394
    %v396 = vpop.f32.mrb[0].mxu0
    %397 = vmatprep.mubr.f32.mxu0 0.0
    %398 = vmatmul.mubr.f32.gmra.mrb[0].mxu0 %v81
    %v399 = vpop.f32.mrb[0].mxu0
    %v400 = vadd.f32 %v266, %v399
    %v401 = vpop.f32.mrb[0].mxu0
    %402 = vmatprep.mubr.f32.mxu0 0.0
    %403 = vmatmul.mubr.f32.gmra.mrb[0].mxu0 %v82
    %v404 = vpop.f32.mrb[0].mxu0
    %v405 = vadd.f32 %v266, %v404
    %v406 = vpop.f32.mrb[0].mxu0
    %407 = vmatprep.mubr.f32.mxu0 0.0
    %408 = vmatmul.mubr.f32.gmra.mrb[0].mxu0 %v83
    %v409 = vpop.f32.mrb[0].mxu0
    %v410 = vadd.f32 %v266, %v409
    %v411 = vpop.f32.mrb[0].mxu0
    %412 = vdwg.mxu0
    %v413 = vmax.f32 %v335, 0.0
    %v414 = vmax.f32 %v340, 0.0
    %v415 = vmax.f32 %v345, 0.0
    %v416 = vmax.f32 %v350, 0.0
    %v417 = vmax.f32 %v355, 0.0
    %v418 = vmax.f32 %v360, 0.0
    %v419 = vmax.f32 %v365, 0.0
    %v420 = vmax.f32 %v370, 0.0
    %v421 = vmax.f32 %v375, 0.0
    %v422 = vmax.f32 %v380, 0.0
    %v423 = vmax.f32 %v385, 0.0
    %v424 = vmax.f32 %v390, 0.0
    %v425 = vmax.f32 %v395, 0.0
    %v426 = vmax.f32 %v400, 0.0
    %v427 = vmax.f32 %v405, 0.0
    %v428 = vmax.f32 %v410, 0.0
    %s429 = scalar_lea.vmem [#allocation6], 128
    %v430 = vld [vmem:[%s429] sm:$0xff]
    %v431 = vld [vmem:[%s429 + $0x8] sm:$0xff]
    %v432 = vld [vmem:[%s429 + $0x10] sm:$0xff]
    %v433 = vld [vmem:[%s429 + $0x18] sm:$0xff]
    %v434 = vld [vmem:[%s429 + $0x20] sm:$0xff]
    %v435 = vld [vmem:[%s429 + $0x28] sm:$0xff]
    %v436 = vld [vmem:[%s429 + $0x30] sm:$0xff]
    %v437 = vld [vmem:[%s429 + $0x38] sm:$0xff]
    %v438 = vld [vmem:[%s429 + $0x40] sm:$0xff]
    %v439 = vld [vmem:[%s429 + $0x48] sm:$0xff]
    %v440 = vld [vmem:[%s429 + $0x50] sm:$0xff]
    %v441 = vld [vmem:[%s429 + $0x58] sm:$0xff]
    %v442 = vld [vmem:[%s429 + $0x60] sm:$0xff]
    %v443 = vld [vmem:[%s429 + $0x68] sm:$0xff]
    %v444 = vld [vmem:[%s429 + $0x70] sm:$0xff]
    %v445 = vld [vmem:[%s429 + $0x78] sm:$0xff]
    %446 = vmatprep.subr.mxu0 0.0
    %447 = vmatpush1.msra.mxu0 %v430
    %448 = vmatprep.subr.mxu0 0.0
    %449 = vmatpush1.msra.mxu0 %v431
    %450 = vmatprep.subr.mxu0 0.0
    %451 = vmatpush1.msra.mxu0 %v432
    %452 = vmatprep.subr.mxu0 0.0
    %453 = vmatpush1.msra.mxu0 %v433
    %454 = vmatprep.subr.mxu0 0.0
    %455 = vmatpush1.msra.mxu0 %v434
    %456 = vmatprep.subr.mxu0 0.0
    %457 = vmatpush1.msra.mxu0 %v435
    %458 = vmatprep.subr.mxu0 0.0
    %459 = vmatpush1.msra.mxu0 %v436
    %460 = vmatprep.subr.mxu0 0.0
    %461 = vmatpush1.msra.mxu0 %v437
    %462 = vmatprep.subr.mxu0 0.0
    %463 = vmatpush1.msra.mxu0 %v438
    %464 = vmatprep.subr.mxu0 0.0
    %465 = vmatpush1.msra.mxu0 %v439
    %466 = vmatprep.subr.mxu0 0.0
    %467 = vmatpush1.msra.mxu0 %v440
    %468 = vmatprep.subr.mxu0 0.0
    %469 = vmatpush1.msra.mxu0 %v441
    %470 = vmatprep.subr.mxu0 0.0
    %471 = vmatpush1.msra.mxu0 %v442
    %472 = vmatprep.subr.mxu0 0.0
    %473 = vmatpush1.msra.mxu0 %v443
    %474 = vmatprep.subr.mxu0 0.0
    %475 = vmatpush1.msra.mxu0 %v444
    %476 = vmatprep.subr.mxu0 0.0
    %477 = vmatpush1.msra.mxu0 %v445
    %478 = vmatprep.subr.mxu0 0.0
    %479 = vmatpush1.msra.mxu0 0.0
    %480 = vmatprep.subr.mxu0 0.0
    %481 = vmatpush1.msra.mxu0 0.0
    %482 = vmatprep.subr.mxu0 0.0
    %483 = vmatpush1.msra.mxu0 0.0
    %484 = vmatprep.subr.mxu0 0.0
    %485 = vmatpush1.msra.mxu0 0.0
    %486 = vmatprep.subr.mxu0 0.0
    %487 = vmatpush1.msra.mxu0 0.0
    %488 = vmatprep.subr.mxu0 0.0
    %489 = vmatpush1.msra.mxu0 0.0
    %490 = vmatprep.subr.mxu0 0.0
    %491 = vmatpush1.msra.mxu0 0.0
    %492 = vmatprep.subr.mxu0 0.0
    %493 = vmatpush1.msra.mxu0 0.0
    %494 = vmatprep.subr.mxu0 0.0
    %495 = vmatpush1.msra.mxu0 0.0
    %496 = vmatprep.subr.mxu0 0.0
    %497 = vmatpush1.msra.mxu0 0.0
    %498 = vmatprep.subr.mxu0 0.0
    %499 = vmatpush1.msra.mxu0 0.0
    %500 = vmatprep.subr.mxu0 0.0
    %501 = vmatpush1.msra.mxu0 0.0
    %502 = vmatprep.subr.mxu0 0.0
    %503 = vmatpush1.msra.mxu0 0.0
    %504 = vmatprep.subr.mxu0 0.0
    %505 = vmatpush1.msra.mxu0 0.0
    %506 = vmatprep.subr.mxu0 0.0
    %507 = vmatpush1.msra.mxu0 0.0
    %508 = vmatprep.subr.mxu0 0.0
    %509 = vmatpush1.msra.mxu0 0.0
    %510 = vmatprep.mubr.f32.mxu0 0.0
    %511 = vmatmul.mubr.f32.gmra.mrb[0].mxu0 %v413
    %v512 = vpop.f32.mrb[0].mxu0
    %v513 = vadd.f32 0.0, %v512
    %v514 = vpop.f32.mrb[0].mxu0
    %515 = vmatprep.mubr.f32.mxu0 0.0
    %516 = vmatmul.mubr.f32.gmra.mrb[0].mxu0 %v414
    %v517 = vpop.f32.mrb[0].mxu0
    %v518 = vadd.f32 0.0, %v517
    %v519 = vpop.f32.mrb[0].mxu0
    %520 = vmatprep.mubr.f32.mxu0 0.0
    %521 = vmatmul.mubr.f32.gmra.mrb[0].mxu0 %v415
    %v522 = vpop.f32.mrb[0].mxu0
    %v523 = vadd.f32 0.0, %v522
    %v524 = vpop.f32.mrb[0].mxu0
    %525 = vmatprep.mubr.f32.mxu0 0.0
    %526 = vmatmul.mubr.f32.gmra.mrb[0].mxu0 %v416
    %v527 = vpop.f32.mrb[0].mxu0
    %v528 = vadd.f32 0.0, %v527
    %v529 = vpop.f32.mrb[0].mxu0
    %530 = vmatprep.mubr.f32.mxu0 0.0
    %531 = vmatmul.mubr.f32.gmra.mrb[0].mxu0 %v417
    %v532 = vpop.f32.mrb[0].mxu0
    %v533 = vadd.f32 0.0, %v532
    %v534 = vpop.f32.mrb[0].mxu0
    %535 = vmatprep.mubr.f32.mxu0 0.0
    %536 = vmatmul.mubr.f32.gmra.mrb[0].mxu0 %v418
    %v537 = vpop.f32.mrb[0].mxu0
    %v538 = vadd.f32 0.0, %v537
    %v539 = vpop.f32.mrb[0].mxu0
    %540 = vmatprep.mubr.f32.mxu0 0.0
    %541 = vmatmul.mubr.f32.gmra.mrb[0].mxu0 %v419
    %v542 = vpop.f32.mrb[0].mxu0
    %v543 = vadd.f32 0.0, %v542
    %v544 = vpop.f32.mrb[0].mxu0
    %545 = vmatprep.mubr.f32.mxu0 0.0
    %546 = vmatmul.mubr.f32.gmra.mrb[0].mxu0 %v420
    %v547 = vpop.f32.mrb[0].mxu0
    %v548 = vadd.f32 0.0, %v547
    %v549 = vpop.f32.mrb[0].mxu0
    %550 = vmatprep.mubr.f32.mxu0 0.0
    %551 = vmatmul.mubr.f32.gmra.mrb[0].mxu0 %v421
    %v552 = vpop.f32.mrb[0].mxu0
    %v553 = vadd.f32 0.0, %v552
    %v554 = vpop.f32.mrb[0].mxu0
    %555 = vmatprep.mubr.f32.mxu0 0.0
    %556 = vmatmul.mubr.f32.gmra.mrb[0].mxu0 %v422
    %v557 = vpop.f32.mrb[0].mxu0
    %v558 = vadd.f32 0.0, %v557
    %v559 = vpop.f32.mrb[0].mxu0
    %560 = vmatprep.mubr.f32.mxu0 0.0
    %561 = vmatmul.mubr.f32.gmra.mrb[0].mxu0 %v423
    %v562 = vpop.f32.mrb[0].mxu0
    %v563 = vadd.f32 0.0, %v562
    %v564 = vpop.f32.mrb[0].mxu0
    %565 = vmatprep.mubr.f32.mxu0 0.0
    %566 = vmatmul.mubr.f32.gmra.mrb[0].mxu0 %v424
    %v567 = vpop.f32.mrb[0].mxu0
    %v568 = vadd.f32 0.0, %v567
    %v569 = vpop.f32.mrb[0].mxu0
    %570 = vmatprep.mubr.f32.mxu0 0.0
    %571 = vmatmul.mubr.f32.gmra.mrb[0].mxu0 %v425
    %v572 = vpop.f32.mrb[0].mxu0
    %v573 = vadd.f32 0.0, %v572
    %v574 = vpop.f32.mrb[0].mxu0
    %575 = vmatprep.mubr.f32.mxu0 0.0
    %576 = vmatmul.mubr.f32.gmra.mrb[0].mxu0 %v426
    %v577 = vpop.f32.mrb[0].mxu0
    %v578 = vadd.f32 0.0, %v577
    %v579 = vpop.f32.mrb[0].mxu0
    %580 = vmatprep.mubr.f32.mxu0 0.0
    %581 = vmatmul.mubr.f32.gmra.mrb[0].mxu0 %v427
    %v582 = vpop.f32.mrb[0].mxu0
    %v583 = vadd.f32 0.0, %v582
    %v584 = vpop.f32.mrb[0].mxu0
    %585 = vmatprep.mubr.f32.mxu0 0.0
    %586 = vmatmul.mubr.f32.gmra.mrb[0].mxu0 %v428
    %v587 = vpop.f32.mrb[0].mxu0
    %v588 = vadd.f32 0.0, %v587
    %v589 = vpop.f32.mrb[0].mxu0
    %590 = vdwg.mxu0
    %s591 = scalar_lea.vmem %s3, 1
    %v592 = vld [vmem:[%s591] sm:$0x1]
    %v594 = vlaneseq
    %v595 = vshrl.u32 %v594, 7
    %v596 = vsub.s32 0, %v595
    %v597 = vrot.slane %v592, %v596
    %599 = vmatprep.subr.mxu0 0.0
    %600 = vmatpush1.msra.mxu0 %v513
    %601 = vmatprep.subr.mxu0 0.0
    %602 = vmatpush1.msra.mxu0 %v518
    %603 = vmatprep.subr.mxu0 0.0
    %604 = vmatpush1.msra.mxu0 %v523
    %605 = vmatprep.subr.mxu0 0.0
    %606 = vmatpush1.msra.mxu0 %v528
    %607 = vmatprep.subr.mxu0 0.0
    %608 = vmatpush1.msra.mxu0 %v533
    %609 = vmatprep.subr.mxu0 0.0
    %610 = vmatpush1.msra.mxu0 %v538
    %611 = vmatprep.subr.mxu0 0.0
    %612 = vmatpush1.msra.mxu0 %v543
    %613 = vmatprep.subr.mxu0 0.0
    %614 = vmatpush1.msra.mxu0 %v548
    %615 = vmatprep.subr.mxu0 0.0
    %616 = vmatpush1.msra.mxu0 %v553
    %617 = vmatprep.subr.mxu0 0.0
    %618 = vmatpush1.msra.mxu0 %v558
    %619 = vmatprep.subr.mxu0 0.0
    %620 = vmatpush1.msra.mxu0 %v563
    %621 = vmatprep.subr.mxu0 0.0
    %622 = vmatpush1.msra.mxu0 %v568
    %623 = vmatprep.subr.mxu0 0.0
    %624 = vmatpush1.msra.mxu0 %v573
    %625 = vmatprep.subr.mxu0 0.0
    %626 = vmatpush1.msra.mxu0 %v578
    %627 = vmatprep.subr.mxu0 0.0
    %628 = vmatpush1.msra.mxu0 %v583
    %629 = vmatprep.subr.mxu0 0.0
    %630 = vmatpush1.msra.mxu0 %v588
    %631 = vmatprep.subr.mxu0 0.0
    %632 = vmatpush1.msra.mxu0 0.0
    %633 = vmatprep.subr.mxu0 0.0
    %634 = vmatpush1.msra.mxu0 0.0
    %635 = vmatprep.subr.mxu0 0.0
    %636 = vmatpush1.msra.mxu0 0.0
    %637 = vmatprep.subr.mxu0 0.0
    %638 = vmatpush1.msra.mxu0 0.0
    %639 = vmatprep.subr.mxu0 0.0
    %640 = vmatpush1.msra.mxu0 0.0
    %641 = vmatprep.subr.mxu0 0.0
    %642 = vmatpush1.msra.mxu0 0.0
    %643 = vmatprep.subr.mxu0 0.0
    %644 = vmatpush1.msra.mxu0 0.0
    %645 = vmatprep.subr.mxu0 0.0
    %646 = vmatpush1.msra.mxu0 0.0
    %647 = vmatprep.subr.mxu0 0.0
    %648 = vmatpush1.msra.mxu0 0.0
    %649 = vmatprep.subr.mxu0 0.0
    %650 = vmatpush1.msra.mxu0 0.0
    %651 = vmatprep.subr.mxu0 0.0
    %652 = vmatpush1.msra.mxu0 0.0
    %653 = vmatprep.subr.mxu0 0.0
    %654 = vmatpush1.msra.mxu0 0.0
    %655 = vmatprep.subr.mxu0 0.0
    %656 = vmatpush1.msra.mxu0 0.0
    %657 = vmatprep.subr.mxu0 0.0
    %658 = vmatpush1.msra.mxu0 0.0
    %659 = vmatprep.subr.mxu0 0.0
    %660 = vmatpush1.msra.mxu0 0.0
    %661 = vmatprep.subr.mxu0 0.0
    %662 = vmatpush1.msra.mxu0 0.0
    %663 = vmatprep.mubr.f32.mxu0 0.0
    %664 = vmatmul.mubr.f32.gmra.mrb[0].mxu0 %v68
    %v665 = vpop.f32.mrb[0].mxu0
    %v666 = vadd.f32 %v597, %v665
    %v667 = vpop.f32.mrb[0].mxu0
    %668 = vmatprep.mubr.f32.mxu0 0.0
    %669 = vmatmul.mubr.f32.gmra.mrb[0].mxu0 %v69
    %v670 = vpop.f32.mrb[0].mxu0
    %v671 = vadd.f32 %v597, %v670
    %v672 = vpop.f32.mrb[0].mxu0
    %673 = vmatprep.mubr.f32.mxu0 0.0
    %674 = vmatmul.mubr.f32.gmra.mrb[0].mxu0 %v70
    %v675 = vpop.f32.mrb[0].mxu0
    %v676 = vadd.f32 %v597, %v675
    %v677 = vpop.f32.mrb[0].mxu0
    %678 = vmatprep.mubr.f32.mxu0 0.0
    %679 = vmatmul.mubr.f32.gmra.mrb[0].mxu0 %v71
    %v680 = vpop.f32.mrb[0].mxu0
    %v681 = vadd.f32 %v597, %v680
    %v682 = vpop.f32.mrb[0].mxu0
    %683 = vmatprep.mubr.f32.mxu0 0.0
    %684 = vmatmul.mubr.f32.gmra.mrb[0].mxu0 %v72
    %v685 = vpop.f32.mrb[0].mxu0
    %v686 = vadd.f32 %v597, %v685
    %v687 = vpop.f32.mrb[0].mxu0
    %688 = vmatprep.mubr.f32.mxu0 0.0
    %689 = vmatmul.mubr.f32.gmra.mrb[0].mxu0 %v73
    %v690 = vpop.f32.mrb[0].mxu0
    %v691 = vadd.f32 %v597, %v690
    %v692 = vpop.f32.mrb[0].mxu0
    %693 = vmatprep.mubr.f32.mxu0 0.0
    %694 = vmatmul.mubr.f32.gmra.mrb[0].mxu0 %v74
    %v695 = vpop.f32.mrb[0].mxu0
    %v696 = vadd.f32 %v597, %v695
    %v697 = vpop.f32.mrb[0].mxu0
    %698 = vmatprep.mubr.f32.mxu0 0.0
    %699 = vmatmul.mubr.f32.gmra.mrb[0].mxu0 %v75
    %v700 = vpop.f32.mrb[0].mxu0
    %v701 = vadd.f32 %v597, %v700
    %v702 = vpop.f32.mrb[0].mxu0
    %703 = vmatprep.mubr.f32.mxu0 0.0
    %704 = vmatmul.mubr.f32.gmra.mrb[0].mxu0 %v76
    %v705 = vpop.f32.mrb[0].mxu0
    %v706 = vadd.f32 %v597, %v705
    %v707 = vpop.f32.mrb[0].mxu0
    %708 = vmatprep.mubr.f32.mxu0 0.0
    %709 = vmatmul.mubr.f32.gmra.mrb[0].mxu0 %v77
    %v710 = vpop.f32.mrb[0].mxu0
    %v711 = vadd.f32 %v597, %v710
    %v712 = vpop.f32.mrb[0].mxu0
    %713 = vmatprep.mubr.f32.mxu0 0.0
    %714 = vmatmul.mubr.f32.gmra.mrb[0].mxu0 %v78
    %v715 = vpop.f32.mrb[0].mxu0
    %v716 = vadd.f32 %v597, %v715
    %v717 = vpop.f32.mrb[0].mxu0
    %718 = vmatprep.mubr.f32.mxu0 0.0
    %719 = vmatmul.mubr.f32.gmra.mrb[0].mxu0 %v79
    %v720 = vpop.f32.mrb[0].mxu0
    %v721 = vadd.f32 %v597, %v720
    %v722 = vpop.f32.mrb[0].mxu0
    %723 = vmatprep.mubr.f32.mxu0 0.0
    %724 = vmatmul.mubr.f32.gmra.mrb[0].mxu0 %v80
    %v725 = vpop.f32.mrb[0].mxu0
    %v726 = vadd.f32 %v597, %v725
    %v727 = vpop.f32.mrb[0].mxu0
    %728 = vmatprep.mubr.f32.mxu0 0.0
    %729 = vmatmul.mubr.f32.gmra.mrb[0].mxu0 %v81
    %v730 = vpop.f32.mrb[0].mxu0
    %v731 = vadd.f32 %v597, %v730
    %v732 = vpop.f32.mrb[0].mxu0
    %733 = vmatprep.mubr.f32.mxu0 0.0
    %734 = vmatmul.mubr.f32.gmra.mrb[0].mxu0 %v82
    %v735 = vpop.f32.mrb[0].mxu0
    %v736 = vadd.f32 %v597, %v735
    %v737 = vpop.f32.mrb[0].mxu0
    %738 = vmatprep.mubr.f32.mxu0 0.0
    %739 = vmatmul.mubr.f32.gmra.mrb[0].mxu0 %v83
    %v740 = vpop.f32.mrb[0].mxu0
    %v741 = vadd.f32 %v597, %v740
    %v742 = vpop.f32.mrb[0].mxu0
    %743 = vdwg.mxu0
    %v744 = vmax.f32 %v666, 0.0
    %v745 = vmax.f32 %v671, 0.0
    %v746 = vmax.f32 %v676, 0.0
    %v747 = vmax.f32 %v681, 0.0
    %v748 = vmax.f32 %v686, 0.0
    %v749 = vmax.f32 %v691, 0.0
    %v750 = vmax.f32 %v696, 0.0
    %v751 = vmax.f32 %v701, 0.0
    %v752 = vmax.f32 %v706, 0.0
    %v753 = vmax.f32 %v711, 0.0
    %v754 = vmax.f32 %v716, 0.0
    %v755 = vmax.f32 %v721, 0.0
    %v756 = vmax.f32 %v726, 0.0
    %v757 = vmax.f32 %v731, 0.0
    %v758 = vmax.f32 %v736, 0.0
    %v759 = vmax.f32 %v741, 0.0
    %v760 = vld [vmem:[%s4] sm:$0xff]
    %v761 = vld [vmem:[%s4 + $0x8] sm:$0xff]
    %v762 = vld [vmem:[%s4 + $0x10] sm:$0xff]
    %v763 = vld [vmem:[%s4 + $0x18] sm:$0xff]
    %v764 = vld [vmem:[%s4 + $0x20] sm:$0xff]
    %v765 = vld [vmem:[%s4 + $0x28] sm:$0xff]
    %v766 = vld [vmem:[%s4 + $0x30] sm:$0xff]
    %v767 = vld [vmem:[%s4 + $0x38] sm:$0xff]
    %v768 = vld [vmem:[%s4 + $0x40] sm:$0xff]
    %v769 = vld [vmem:[%s4 + $0x48] sm:$0xff]
    %v770 = vld [vmem:[%s4 + $0x50] sm:$0xff]
    %v771 = vld [vmem:[%s4 + $0x58] sm:$0xff]
    %v772 = vld [vmem:[%s4 + $0x60] sm:$0xff]
    %v773 = vld [vmem:[%s4 + $0x68] sm:$0xff]
    %v774 = vld [vmem:[%s4 + $0x70] sm:$0xff]
    %v775 = vld [vmem:[%s4 + $0x78] sm:$0xff]
    %vm776 = vcmp.gt.f32.partialorder %v760, 0.5
    %vm777 = vcmp.gt.f32.partialorder %v761, 0.5
    %vm778 = vcmp.gt.f32.partialorder %v762, 0.5
    %vm779 = vcmp.gt.f32.partialorder %v763, 0.5
    %vm780 = vcmp.gt.f32.partialorder %v764, 0.5
    %vm781 = vcmp.gt.f32.partialorder %v765, 0.5
    %vm782 = vcmp.gt.f32.partialorder %v766, 0.5
    %vm783 = vcmp.gt.f32.partialorder %v767, 0.5
    %vm784 = vcmp.gt.f32.partialorder %v768, 0.5
    %vm785 = vcmp.gt.f32.partialorder %v769, 0.5
    %vm786 = vcmp.gt.f32.partialorder %v770, 0.5
    %vm787 = vcmp.gt.f32.partialorder %v771, 0.5
    %vm788 = vcmp.gt.f32.partialorder %v772, 0.5
    %vm789 = vcmp.gt.f32.partialorder %v773, 0.5
    %vm790 = vcmp.gt.f32.partialorder %v774, 0.5
    %vm791 = vcmp.gt.f32.partialorder %v775, 0.5
    %v792 = vsel %vm776, 1, 0
    %v793 = vsel %vm777, 1, 0
    %v794 = vsel %vm778, 1, 0
    %v795 = vsel %vm779, 1, 0
    %v796 = vsel %vm780, 1, 0
    %v797 = vsel %vm781, 1, 0
    %v798 = vsel %vm782, 1, 0
    %v799 = vsel %vm783, 1, 0
    %v800 = vsel %vm784, 1, 0
    %v801 = vsel %vm785, 1, 0
    %v802 = vsel %vm786, 1, 0
    %v803 = vsel %vm787, 1, 0
    %v804 = vsel %vm788, 1, 0
    %v805 = vsel %vm789, 1, 0
    %v806 = vsel %vm790, 1, 0
    %v807 = vsel %vm791, 1, 0
    %808 = vset.pattern.permute.xlu0 0
    %809 = vperm.xlu0 %808, %v792
    %v810 = vpop.permute.xlu0 %809
    %811 = vset.pattern.permute.xlu0 0
    %812 = vperm.xlu0 %811, %v793
    %v813 = vpop.permute.xlu0 %812
    %814 = vset.pattern.permute.xlu0 0
    %815 = vperm.xlu0 %814, %v794
    %v816 = vpop.permute.xlu0 %815
    %817 = vset.pattern.permute.xlu0 0
    %818 = vperm.xlu0 %817, %v795
    %v819 = vpop.permute.xlu0 %818
    %820 = vset.pattern.permute.xlu0 0
    %821 = vperm.xlu0 %820, %v796
    %v822 = vpop.permute.xlu0 %821
    %823 = vset.pattern.permute.xlu0 0
    %824 = vperm.xlu0 %823, %v797
    %v825 = vpop.permute.xlu0 %824
    %826 = vset.pattern.permute.xlu0 0
    %827 = vperm.xlu0 %826, %v798
    %v828 = vpop.permute.xlu0 %827
    %829 = vset.pattern.permute.xlu0 0
    %830 = vperm.xlu0 %829, %v799
    %v831 = vpop.permute.xlu0 %830
    %832 = vset.pattern.permute.xlu0 0
    %833 = vperm.xlu0 %832, %v800
    %v834 = vpop.permute.xlu0 %833
    %835 = vset.pattern.permute.xlu0 0
    %836 = vperm.xlu0 %835, %v801
    %v837 = vpop.permute.xlu0 %836
    %838 = vset.pattern.permute.xlu0 0
    %839 = vperm.xlu0 %838, %v802
    %v840 = vpop.permute.xlu0 %839
    %841 = vset.pattern.permute.xlu0 0
    %842 = vperm.xlu0 %841, %v803
    %v843 = vpop.permute.xlu0 %842
    %844 = vset.pattern.permute.xlu0 0
    %845 = vperm.xlu0 %844, %v804
    %v846 = vpop.permute.xlu0 %845
    %847 = vset.pattern.permute.xlu0 0
    %848 = vperm.xlu0 %847, %v805
    %v849 = vpop.permute.xlu0 %848
    %850 = vset.pattern.permute.xlu0 0
    %851 = vperm.xlu0 %850, %v806
    %v852 = vpop.permute.xlu0 %851
    %853 = vset.pattern.permute.xlu0 0
    %854 = vperm.xlu0 %853, %v807
    %v855 = vpop.permute.xlu0 %854
    %vm856 = vcmp.eq.s32.totalorder %v810, 1
    %vm857 = vcmp.eq.s32.totalorder %v813, 1
    %vm858 = vcmp.eq.s32.totalorder %v816, 1
    %vm859 = vcmp.eq.s32.totalorder %v819, 1
    %vm860 = vcmp.eq.s32.totalorder %v822, 1
    %vm861 = vcmp.eq.s32.totalorder %v825, 1
    %vm862 = vcmp.eq.s32.totalorder %v828, 1
    %vm863 = vcmp.eq.s32.totalorder %v831, 1
    %vm864 = vcmp.eq.s32.totalorder %v834, 1
    %vm865 = vcmp.eq.s32.totalorder %v837, 1
    %vm866 = vcmp.eq.s32.totalorder %v840, 1
    %vm867 = vcmp.eq.s32.totalorder %v843, 1
    %vm868 = vcmp.eq.s32.totalorder %v846, 1
    %vm869 = vcmp.eq.s32.totalorder %v849, 1
    %vm870 = vcmp.eq.s32.totalorder %v852, 1
    %vm871 = vcmp.eq.s32.totalorder %v855, 1
    %v872 = vsel %vm856, %v744, -inf
    %v873 = vsel %vm857, %v745, -inf
    %v874 = vsel %vm858, %v746, -inf
    %v875 = vsel %vm859, %v747, -inf
    %v876 = vsel %vm860, %v748, -inf
    %v877 = vsel %vm861, %v749, -inf
    %v878 = vsel %vm862, %v750, -inf
    %v879 = vsel %vm863, %v751, -inf
    %v880 = vsel %vm864, %v752, -inf
    %v881 = vsel %vm865, %v753, -inf
    %v882 = vsel %vm866, %v754, -inf
    %v883 = vsel %vm867, %v755, -inf
    %v884 = vsel %vm868, %v756, -inf
    %v885 = vsel %vm869, %v757, -inf
    %v886 = vsel %vm870, %v758, -inf
    %v887 = vsel %vm871, %v759, -inf
    %v888 = vmax.f32 %v872, %v876
    %v889 = vmax.f32 %v873, %v877
    %v890 = vmax.f32 %v874, %v878
    %v891 = vmax.f32 %v875, %v879
    %v892 = vmax.f32 %v888, %v880
    %v893 = vmax.f32 %v889, %v881
    %v894 = vmax.f32 %v890, %v882
    %v895 = vmax.f32 %v891, %v883
    %v896 = vmax.f32 %v892, %v884
    %v897 = vmax.f32 %v893, %v885
    %v898 = vmax.f32 %v894, %v886
    %v899 = vmax.f32 %v895, %v887
    %v900 = vmax.f32 %v896, %v897
    %v901 = vmax.f32 %v898, %v899
    %v902 = vmax.f32 %v900, %v901
    %v903 = vrot.slane %v902, 4
    %v904 = vmax.f32 %v902, %v903
    %v905 = vrot.slane %v904, 2
    %v906 = vmax.f32 %v904, %v905
    %v907 = vrot.slane %v906, 1
    %v908 = vmax.f32 %v906, %v907
    %909 = vset.pattern.permute.xlu0 1
    %910 = vperm.xlu0 %909, %v792
    %v911 = vpop.permute.xlu0 %910
    %912 = vset.pattern.permute.xlu0 1
    %913 = vperm.xlu0 %912, %v793
    %v914 = vpop.permute.xlu0 %913
    %915 = vset.pattern.permute.xlu0 1
    %916 = vperm.xlu0 %915, %v794
    %v917 = vpop.permute.xlu0 %916
    %918 = vset.pattern.permute.xlu0 1
    %919 = vperm.xlu0 %918, %v795
    %v920 = vpop.permute.xlu0 %919
    %921 = vset.pattern.permute.xlu0 1
    %922 = vperm.xlu0 %921, %v796
    %v923 = vpop.permute.xlu0 %922
    %924 = vset.pattern.permute.xlu0 1
    %925 = vperm.xlu0 %924, %v797
    %v926 = vpop.permute.xlu0 %925
    %927 = vset.pattern.permute.xlu0 1
    %928 = vperm.xlu0 %927, %v798
    %v929 = vpop.permute.xlu0 %928
    %930 = vset.pattern.permute.xlu0 1
    %931 = vperm.xlu0 %930, %v799
    %v932 = vpop.permute.xlu0 %931
    %933 = vset.pattern.permute.xlu0 1
    %934 = vperm.xlu0 %933, %v800
    %v935 = vpop.permute.xlu0 %934
    %936 = vset.pattern.permute.xlu0 1
    %937 = vperm.xlu0 %936, %v801
    %v938 = vpop.permute.xlu0 %937
    %939 = vset.pattern.permute.xlu0 1
    %940 = vperm.xlu0 %939, %v802
    %v941 = vpop.permute.xlu0 %940
    %942 = vset.pattern.permute.xlu0 1
    %943 = vperm.xlu0 %942, %v803
    %v944 = vpop.permute.xlu0 %943
    %945 = vset.pattern.permute.xlu0 1
    %946 = vperm.xlu0 %945, %v804
    %v947 = vpop.permute.xlu0 %946
    %948 = vset.pattern.permute.xlu0 1
    %949 = vperm.xlu0 %948, %v805
    %v950 = vpop.permute.xlu0 %949
    %951 = vset.pattern.permute.xlu0 1
    %952 = vperm.xlu0 %951, %v806
    %v953 = vpop.permute.xlu0 %952
    %954 = vset.pattern.permute.xlu0 1
    %955 = vperm.xlu0 %954, %v807
    %v956 = vpop.permute.xlu0 %955
    %vm957 = vcmp.eq.s32.totalorder %v911, 1
    %vm958 = vcmp.eq.s32.totalorder %v914, 1
    %vm959 = vcmp.eq.s32.totalorder %v917, 1
    %vm960 = vcmp.eq.s32.totalorder %v920, 1
    %vm961 = vcmp.eq.s32.totalorder %v923, 1
    %vm962 = vcmp.eq.s32.totalorder %v926, 1
    %vm963 = vcmp.eq.s32.totalorder %v929, 1
    %vm964 = vcmp.eq.s32.totalorder %v932, 1
    %vm965 = vcmp.eq.s32.totalorder %v935, 1
    %vm966 = vcmp.eq.s32.totalorder %v938, 1
    %vm967 = vcmp.eq.s32.totalorder %v941, 1
    %vm968 = vcmp.eq.s32.totalorder %v944, 1
    %vm969 = vcmp.eq.s32.totalorder %v947, 1
    %vm970 = vcmp.eq.s32.totalorder %v950, 1
    %vm971 = vcmp.eq.s32.totalorder %v953, 1
    %vm972 = vcmp.eq.s32.totalorder %v956, 1
    %v973 = vsel %vm957, %v744, -inf
    %v974 = vsel %vm958, %v745, -inf
    %v975 = vsel %vm959, %v746, -inf
    %v976 = vsel %vm960, %v747, -inf
    %v977 = vsel %vm961, %v748, -inf
    %v978 = vsel %vm962, %v749, -inf
    %v979 = vsel %vm963, %v750, -inf
    %v980 = vsel %vm964, %v751, -inf
    %v981 = vsel %vm965, %v752, -inf
    %v982 = vsel %vm966, %v753, -inf
    %v983 = vsel %vm967, %v754, -inf
    %v984 = vsel %vm968, %v755, -inf
    %v985 = vsel %vm969, %v756, -inf
    %v986 = vsel %vm970, %v757, -inf
    %v987 = vsel %vm971, %v758, -inf
    %v988 = vsel %vm972, %v759, -inf
    %v989 = vmax.f32 %v973, %v977
    %v990 = vmax.f32 %v974, %v978
    %v991 = vmax.f32 %v975, %v979
    %v992 = vmax.f32 %v976, %v980
    %v993 = vmax.f32 %v989, %v981
    %v994 = vmax.f32 %v990, %v982
    %v995 = vmax.f32 %v991, %v983
    %v996 = vmax.f32 %v992, %v984
    %v997 = vmax.f32 %v993, %v985
    %v998 = vmax.f32 %v994, %v986
    %v999 = vmax.f32 %v995, %v987
    %v1000 = vmax.f32 %v996, %v988
    %v1001 = vmax.f32 %v997, %v998
    %v1002 = vmax.f32 %v999, %v1000
    %v1003 = vmax.f32 %v1001, %v1002
    %v1004 = vrot.slane %v1003, 4
    %v1005 = vmax.f32 %v1003, %v1004
    %v1006 = vrot.slane %v1005, 2
    %v1007 = vmax.f32 %v1005, %v1006
    %v1008 = vrot.slane %v1007, 1
    %v1009 = vmax.f32 %v1007, %v1008
    %1010 = vst [vmem:[#allocation2] sm:$0x1] %v908
    %1011 = vst [vmem:[#allocation2 + $0x1] sm:$0x1] %v1009
    %v1012 = vld [vmem:[#allocation2] sm:$0x3]
    %v1013 = vld [vmem:[#allocation8] sm:$0xff]
    %v1014 = vld [vmem:[#allocation8 + $0x8] sm:$0xff]
    %v1015 = vld [vmem:[#allocation8 + $0x10] sm:$0xff]
    %v1016 = vld [vmem:[#allocation8 + $0x18] sm:$0xff]
    %v1017 = vld [vmem:[#allocation8 + $0x20] sm:$0xff]
    %v1018 = vld [vmem:[#allocation8 + $0x28] sm:$0xff]
    %v1019 = vld [vmem:[#allocation8 + $0x30] sm:$0xff]
    %v1020 = vld [vmem:[#allocation8 + $0x38] sm:$0xff]
    %v1021 = vld [vmem:[#allocation8 + $0x40] sm:$0xff]
    %v1022 = vld [vmem:[#allocation8 + $0x48] sm:$0xff]
    %v1023 = vld [vmem:[#allocation8 + $0x50] sm:$0xff]
    %v1024 = vld [vmem:[#allocation8 + $0x58] sm:$0xff]
    %v1025 = vld [vmem:[#allocation8 + $0x60] sm:$0xff]
    %v1026 = vld [vmem:[#allocation8 + $0x68] sm:$0xff]
    %v1027 = vld [vmem:[#allocation8 + $0x70] sm:$0xff]
    %v1028 = vld [vmem:[#allocation8 + $0x78] sm:$0xff]
    %v1029 = vld [vmem:[%s6] sm:$0x1]
    %v1031 = vlaneseq
    %v1032 = vshrl.u32 %v1031, 7
    %v1033 = vsub.s32 0, %v1032
    %v1034 = vrot.slane %v1029, %v1033
    %1036 = vmatprep.subr.mxu0 0.0
    %1037 = vmatpush1.msra.mxu0 %v1013
    %1038 = vmatprep.subr.mxu0 0.0
    %1039 = vmatpush1.msra.mxu0 %v1014
    %1040 = vmatprep.subr.mxu0 0.0
    %1041 = vmatpush1.msra.mxu0 %v1015
    %1042 = vmatprep.subr.mxu0 0.0
    %1043 = vmatpush1.msra.mxu0 %v1016
    %1044 = vmatprep.subr.mxu0 0.0
    %1045 = vmatpush1.msra.mxu0 %v1017
    %1046 = vmatprep.subr.mxu0 0.0
    %1047 = vmatpush1.msra.mxu0 %v1018
    %1048 = vmatprep.subr.mxu0 0.0
    %1049 = vmatpush1.msra.mxu0 %v1019
    %1050 = vmatprep.subr.mxu0 0.0
    %1051 = vmatpush1.msra.mxu0 %v1020
    %1052 = vmatprep.subr.mxu0 0.0
    %1053 = vmatpush1.msra.mxu0 %v1021
    %1054 = vmatprep.subr.mxu0 0.0
    %1055 = vmatpush1.msra.mxu0 %v1022
    %1056 = vmatprep.subr.mxu0 0.0
    %1057 = vmatpush1.msra.mxu0 %v1023
    %1058 = vmatprep.subr.mxu0 0.0
    %1059 = vmatpush1.msra.mxu0 %v1024
    %1060 = vmatprep.subr.mxu0 0.0
    %1061 = vmatpush1.msra.mxu0 %v1025
    %1062 = vmatprep.subr.mxu0 0.0
    %1063 = vmatpush1.msra.mxu0 %v1026
    %1064 = vmatprep.subr.mxu0 0.0
    %1065 = vmatpush1.msra.mxu0 %v1027
    %1066 = vmatprep.subr.mxu0 0.0
    %1067 = vmatpush1.msra.mxu0 %v1028
    %1068 = vmatprep.subr.mxu0 0.0
    %1069 = vmatpush1.msra.mxu0 0.0
    %1070 = vmatprep.subr.mxu0 0.0
    %1071 = vmatpush1.msra.mxu0 0.0
    %1072 = vmatprep.subr.mxu0 0.0
    %1073 = vmatpush1.msra.mxu0 0.0
    %1074 = vmatprep.subr.mxu0 0.0
    %1075 = vmatpush1.msra.mxu0 0.0
    %1076 = vmatprep.subr.mxu0 0.0
    %1077 = vmatpush1.msra.mxu0 0.0
    %1078 = vmatprep.subr.mxu0 0.0
    %1079 = vmatpush1.msra.mxu0 0.0
    %1080 = vmatprep.subr.mxu0 0.0
    %1081 = vmatpush1.msra.mxu0 0.0
    %1082 = vmatprep.subr.mxu0 0.0
    %1083 = vmatpush1.msra.mxu0 0.0
    %1084 = vmatprep.subr.mxu0 0.0
    %1085 = vmatpush1.msra.mxu0 0.0
    %1086 = vmatprep.subr.mxu0 0.0
    %1087 = vmatpush1.msra.mxu0 0.0
    %1088 = vmatprep.subr.mxu0 0.0
    %1089 = vmatpush1.msra.mxu0 0.0
    %1090 = vmatprep.subr.mxu0 0.0
    %1091 = vmatpush1.msra.mxu0 0.0
    %1092 = vmatprep.subr.mxu0 0.0
    %1093 = vmatpush1.msra.mxu0 0.0
    %1094 = vmatprep.subr.mxu0 0.0
    %1095 = vmatpush1.msra.mxu0 0.0
    %1096 = vmatprep.subr.mxu0 0.0
    %1097 = vmatpush1.msra.mxu0 0.0
    %1098 = vmatprep.subr.mxu0 0.0
    %1099 = vmatpush1.msra.mxu0 0.0
    %1100 = vmatprep.mubr.f32.mxu0 0.0
    %1101 = vmatmul.mubr.f32.gmra.mrb[0].mxu0 %v1012
    %v1102 = vpop.f32.mrb[0].mxu0
    %v1103 = vadd.f32 %v1034, %v1102
    %v1104 = vpop.f32.mrb[0].mxu0
    %1105 = vdwg.mxu0
    %1106 = vst [vmem:[#allocation9] sm:$0x3] %v1103
    // Predicated region
    $region42: #{tpu_custom_call.1} parent=1 // pred_check
      _
    $region43: #{tpu_custom_call.1} parent=1 // pred_check_branch
      %1108 = sbr.rel (0) target = $region45
    $region44: #{tpu_custom_call.1} parent=1 // pred_region
      %s1110 = ssub.s32 32, 32
      %1111 = vsyncadd [#allocation5], %s1110
      %s1113 = sshll.u32 [#allocation9], 4
      %s1114 = int_to_ptr.vmem [resolvable:$true] %s1113
      %1116 = dma.vmem_to_hbm [thread:$0]  %s1114, 32, %s7, [#allocation5]
    $region45: #{tpu_custom_call.1} parent=1 // pred_fallthru
      _
    // Predicated region
    $region46: #{tpu_custom_call.1} parent=1 // pred_check
      _
    $region47: #{tpu_custom_call.1} parent=1 // pred_check_branch
      %1118 = sbr.rel (0) target = $region49
    $region48: #{tpu_custom_call.1} parent=1 // pred_region
      %1119 = dma.done [#allocation5], 32
    $region49: #{tpu_custom_call.1} parent=1 // pred_fallthru
      _
    %1120 = vsyncpa [#allocation4], 1
    %1121 = vsyncpa [#allocation7], 1
    %1122 = vsyncpa [#allocation5], 1

</llo_original>
